<compile_context>
chip_gen: v6e
topology: v6e:2x2x1
jax: 0.10.0
libtpu: 0.0.40
codegen_flags: <defaults>
</compile_context>

<pallas_src>
import functools

import jax
import jax.numpy as jnp
import numpy as np
from jax.experimental import pallas as pl
from jax.experimental.pallas import tpu as pltpu


def _attention_pool_kernel(x_ref, pos0_ref, possp_ref,
                           wq_ref, bq_ref, wkv_ref, bkv_ref,
                           wc_ref, bc_ref, seg_ref, segt_ref, o_ref,
                           *, num_heads):
    bsz, hw, c = x_ref.shape                      # (B_TILE, HW, C) block
    hd = c // num_heads
    scaling = float(hd) ** -0.5
    cd = x_ref.dtype                              # MXU compute dtype (f32 / bf16)

    # ---- token construction (f32); pooled token kept separate (no ragged cat)
    xf = x_ref[...].astype(jnp.float32)                        # (B, HW, C)
    cls = jnp.mean(xf, axis=1) + pos0_ref[...]                 # (B, C)
    sp = xf + possp_ref[...][None, :, :]                       # (B, HW, C)

    cls_c = cls.astype(cd)                                     # (B, C)
    sp_c = sp.reshape(bsz * hw, c).astype(cd)                  # (B*HW, C)

    # ---- projections (weights pre-transposed: y = x @ W^T + b)
    # q only needed for the pooled token; k/v fused into one (C, 2C) matmul.
    q = (jnp.dot(cls_c, wq_ref[...], preferred_element_type=jnp.float32)
         + bq_ref[...]) * scaling                              # (B, C)
    kv_cls = (jnp.dot(cls_c, wkv_ref[...], preferred_element_type=jnp.float32)
              + bkv_ref[...])                                  # (B, 2C)
    kv_sp = (jnp.dot(sp_c, wkv_ref[...], preferred_element_type=jnp.float32)
             + bkv_ref[...])                                   # (B*HW, 2C)
    k_cls, v_cls = kv_cls[:, :c], kv_cls[:, c:]                # (B, C) x2
    k_sp, v_sp = kv_sp[:, :c], kv_sp[:, c:]                    # (B*HW, C) x2

    # ---- per-head scores via the precomputed segmentation matrix
    # seg[e, h] = 1 iff channel e belongs to head h.
    seg = seg_ref[...]                                         # (C, H) f32
    seg_t = segt_ref[...]                                      # (H, C) f32

    qk_sp = k_sp.reshape(bsz, hw, c) * q[:, None, :]           # (B, HW, C)
    s_sp = jnp.dot(qk_sp.reshape(bsz * hw, c), seg,
                   preferred_element_type=jnp.float32
                   ).reshape(bsz, hw, num_heads)               # (B, HW, H)
    s_cls = jnp.dot(k_cls * q, seg,
                    preferred_element_type=jnp.float32)        # (B, H)

    # ---- softmax over T = HW + 1 tokens (pooled token handled separately)
    m = jnp.maximum(jnp.max(s_sp, axis=1), s_cls)              # (B, H)
    p_sp = jnp.exp(s_sp - m[:, None, :])                       # (B, HW, H)
    p_cls = jnp.exp(s_cls - m)                                 # (B, H)
    inv = 1.0 / (jnp.sum(p_sp, axis=1) + p_cls)                # (B, H)
    a_sp = p_sp * inv[:, None, :]                              # (B, HW, H)
    a_cls = p_cls * inv                                        # (B, H)

    # ---- context: ctx[b, e] = sum_t attn[b, t, head(e)] * v[b, t, e]
    a_full_sp = jnp.dot(a_sp.reshape(bsz * hw, num_heads), seg_t,
                        preferred_element_type=jnp.float32
                        ).reshape(bsz, hw, c)                  # (B, HW, C)
    a_full_cls = jnp.dot(a_cls, seg_t,
                         preferred_element_type=jnp.float32)   # (B, C)
    ctx = (jnp.sum(a_full_sp * v_sp.reshape(bsz, hw, c), axis=1)
           + a_full_cls * v_cls)                               # (B, C)

    # ---- output projection (out dim padded to 128 lanes -> unmasked store)
    out = jnp.dot(ctx.astype(cd), wc_ref[...],
                  preferred_element_type=jnp.float32) + bc_ref[...]   # (B, O_pad)
    o_ref[...] = out.astype(o_ref.dtype)


def attention_pool_2d(x_nchw, params, num_heads, *, b_tile=8,
                      compute_dtype=jnp.float32):
    """Pallas implementation of AttentionPool2d.forward.

    x_nchw: (N, C, H, W) float32, C == embed_dim.
    Returns (N, output_dim) float32.
    """
    n, c, h, w = x_nchw.shape
    hw = h * w
    out_dim = params["wc"].shape[0]
    assert c % num_heads == 0
    hd = c // num_heads

    # Fused NCHW -> (N, HW, C) transpose + cast to the MXU compute dtype.
    x = jnp.transpose(x_nchw.reshape(n, c, hw), (0, 2, 1)).astype(compute_dtype)

    grid_n = pl.cdiv(n, b_tile)
    n_pad = grid_n * b_tile
    if n_pad != n:
        x = jnp.pad(x, ((0, n_pad - n), (0, 0), (0, 0)))

    # Pad output channels to a multiple of 128 for lane-dense stores.
    out_pad = ((out_dim + 127) // 128) * 128

    f32 = jnp.float32
    pos = params["pos"].astype(f32)
    pos0, pos_sp = pos[0:1], pos[1:]                       # (1, C), (HW, C)

    # Pre-transposed weights (one XLA transpose, not one per grid step).
    wqT = params["wq"].T.astype(compute_dtype)                              # (C, C)
    wkvT = jnp.concatenate([params["wk"].T, params["wv"].T],
                           axis=1).astype(compute_dtype)                    # (C, 2C)
    wcT = jnp.pad(params["wc"].T,
                  ((0, 0), (0, out_pad - out_dim))).astype(compute_dtype)   # (C, O_pad)
    bq = params["bq"].reshape(1, c).astype(f32)
    bkv = jnp.concatenate([params["bk"], params["bv"]]).reshape(1, 2 * c).astype(f32)
    bc = jnp.pad(params["bc"], (0, out_pad - out_dim)).reshape(1, out_pad).astype(f32)

    # Head-segmentation matrix hoisted out of the kernel (and its transpose).
    seg_np = ((np.arange(c)[:, None] // hd)
              == np.arange(num_heads)[None, :]).astype(np.float32)
    seg = jnp.asarray(seg_np)                              # (C, H)
    seg_t = jnp.asarray(seg_np.T)                          # (H, C)

    kernel = functools.partial(_attention_pool_kernel, num_heads=num_heads)

    const2 = lambda b: (0, 0)
    out = pl.pallas_call(
        kernel,
        out_shape=jax.ShapeDtypeStruct((n_pad, out_pad), jnp.float32),
        grid=(grid_n,),
        in_specs=[
            pl.BlockSpec((b_tile, hw, c), lambda b: (b, 0, 0)),   # x
            pl.BlockSpec((1, c), const2),                         # pos (pooled row)
            pl.BlockSpec((hw, c), const2),                        # pos (spatial rows)
            pl.BlockSpec((c, c), const2),                         # wq^T
            pl.BlockSpec((1, c), const2),                         # bq
            pl.BlockSpec((c, 2 * c), const2),                     # [wk^T | wv^T]
            pl.BlockSpec((1, 2 * c), const2),                     # [bk | bv]
            pl.BlockSpec((c, out_pad), const2),                   # wc^T (padded)
            pl.BlockSpec((1, out_pad), const2),                   # bc   (padded)
            pl.BlockSpec((c, num_heads), const2),                 # seg
            pl.BlockSpec((num_heads, c), const2),                 # seg^T
        ],
        out_specs=pl.BlockSpec((b_tile, out_pad), lambda b: (b, 0)),
        compiler_params=pltpu.CompilerParams(
            dimension_semantics=("parallel",)),
    )(x, pos0, pos_sp, wqT, bq, wkvT, bkv, wcT, bc, seg, seg_t)

    return out[:n, :out_dim]


def attention_pool_2d_reference(x_nchw, params, num_heads):
    """Pure-JAX reference mirroring F.multi_head_attention_forward semantics."""
    n, c, h, w = x_nchw.shape
    e = c
    hd = e // num_heads
    x = jnp.transpose(x_nchw.reshape(n, c, h * w), (2, 0, 1))           # (HW, N, C)
    x = jnp.concatenate([x.mean(axis=0, keepdims=True), x], axis=0)     # (T, N, C)
    x = x + params["pos"][:, None, :]
    tlen = x.shape[0]

    q = x[:1] @ params["wq"].T + params["bq"]                           # (1, N, E)
    k = x @ params["wk"].T + params["bk"]                               # (T, N, E)
    v = x @ params["wv"].T + params["bv"]                               # (T, N, E)
    q = q * (hd ** -0.5)

    q = q.reshape(1, n * num_heads, hd).transpose(1, 0, 2)              # (N*H, 1, hd)
    k = k.reshape(tlen, n * num_heads, hd).transpose(1, 0, 2)           # (N*H, T, hd)
    v = v.reshape(tlen, n * num_heads, hd).transpose(1, 0, 2)           # (N*H, T, hd)

    attn = jax.nn.softmax(q @ jnp.swapaxes(k, -1, -2), axis=-1)         # (N*H, 1, T)
    out = attn @ v                                                      # (N*H, 1, hd)
    out = out.transpose(1, 0, 2).reshape(1, n, e)
    out = out @ params["wc"].T + params["bc"]                           # (1, N, O)
    return out[0]


def init_params(key, spacial_dim, embed_dim, output_dim):
    """Deterministic synthetic parameters (same shapes as the nn.Module)."""
    ks = jax.random.split(key, 9)
    t = spacial_dim ** 2 + 1
    pos = jax.random.normal(ks[0], (t, embed_dim), jnp.float32) / (embed_dim ** 0.5)
    s = 1.0 / (embed_dim ** 0.5)
    return {
        "pos": pos,
        "wq": jax.random.normal(ks[1], (embed_dim, embed_dim), jnp.float32) * s,
        "bq": jax.random.normal(ks[2], (embed_dim,), jnp.float32) * s,
        "wk": jax.random.normal(ks[3], (embed_dim, embed_dim), jnp.float32) * s,
        "bk": jax.random.normal(ks[4], (embed_dim,), jnp.float32) * s,
        "wv": jax.random.normal(ks[5], (embed_dim, embed_dim), jnp.float32) * s,
        "bv": jax.random.normal(ks[6], (embed_dim,), jnp.float32) * s,
        "wc": jax.random.normal(ks[7], (output_dim, embed_dim), jnp.float32) * s,
        "bc": jax.random.normal(ks[8], (output_dim,), jnp.float32) * s,
    }


if __name__ == "__main__":
    batch = 16
    spacial_dim = 4          # H = W = 4 -> 16 spatial tokens (+1 pooled token)
    embed_dim = 128          # C
    num_heads = 8            # head_dim = 16
    output_dim = 64

    key = jax.random.PRNGKey(0)
    k_x, k_p = jax.random.split(key)
    x = jax.random.normal(k_x, (batch, embed_dim, spacial_dim, spacial_dim),
                          jnp.float32)
    params = init_params(k_p, spacial_dim, embed_dim, output_dim)

    ref = attention_pool_2d_reference(x, params, num_heads)

    # f32 compute path (tight check). B_TILE = 8 -> grid = 2.
    out = attention_pool_2d(x, params, num_heads, b_tile=8,
                            compute_dtype=jnp.float32)
    out = jax.block_until_ready(out)
    np.testing.assert_allclose(np.asarray(out), np.asarray(ref),
                               rtol=2e-3, atol=2e-3)

    # bf16 compute path (halved weight VMEM/DMA; f32 accumulation) — loose check.
    out_bf16 = attention_pool_2d(x, params, num_heads, b_tile=8,
                                 compute_dtype=jnp.bfloat16)
    out_bf16 = jax.block_until_ready(out_bf16)
    np.testing.assert_allclose(np.asarray(out_bf16), np.asarray(ref),
                               rtol=1e-1, atol=1e-1)

    print("KERNEL_OK")
</pallas_src>

<mosaic_0001>
module attributes {stable_mosaic.version = 11 : i64} {
  func.func @_attention_pool_kernel(%arg0: i32, %arg1: memref<8x16x128xf32, #tpu.memory_space<vmem>>, %arg2: memref<1x128xf32, #tpu.memory_space<vmem>>, %arg3: memref<16x128xf32, #tpu.memory_space<vmem>>, %arg4: memref<128x128xf32, #tpu.memory_space<vmem>>, %arg5: memref<1x128xf32, #tpu.memory_space<vmem>>, %arg6: memref<128x256xf32, #tpu.memory_space<vmem>>, %arg7: memref<1x256xf32, #tpu.memory_space<vmem>>, %arg8: memref<128x128xf32, #tpu.memory_space<vmem>>, %arg9: memref<1x128xf32, #tpu.memory_space<vmem>>, %arg10: memref<128x8xf32, #tpu.memory_space<vmem>>, %arg11: memref<8x128xf32, #tpu.memory_space<vmem>>, %arg12: memref<8x128xf32, #tpu.memory_space<vmem>>) attributes {dimension_semantics = [#tpu.dimension_semantics<parallel>], iteration_bounds = array<i64: 2>, scalar_prefetch = 0 : i64, scratch_operands = 0 : i64, tpu.core_type = #tpu.core_type<tc>, window_params = [{transform_indices = @transform_0, window_bounds = array<i64: 8, 16, 128>}, {pipeline_mode = #tpu.pipeline_mode<synchronous>, transform_indices = @transform_1, window_bounds = array<i64: 1, 128>}, {pipeline_mode = #tpu.pipeline_mode<synchronous>, transform_indices = @transform_2, window_bounds = array<i64: 16, 128>}, {pipeline_mode = #tpu.pipeline_mode<synchronous>, transform_indices = @transform_3, window_bounds = array<i64: 128, 128>}, {pipeline_mode = #tpu.pipeline_mode<synchronous>, transform_indices = @transform_4, window_bounds = array<i64: 1, 128>}, {pipeline_mode = #tpu.pipeline_mode<synchronous>, transform_indices = @transform_5, window_bounds = array<i64: 128, 256>}, {pipeline_mode = #tpu.pipeline_mode<synchronous>, transform_indices = @transform_6, window_bounds = array<i64: 1, 256>}, {pipeline_mode = #tpu.pipeline_mode<synchronous>, transform_indices = @transform_7, window_bounds = array<i64: 128, 128>}, {pipeline_mode = #tpu.pipeline_mode<synchronous>, transform_indices = @transform_8, window_bounds = array<i64: 1, 128>}, {pipeline_mode = #tpu.pipeline_mode<synchronous>, transform_indices = @transform_9, window_bounds = array<i64: 128, 8>}, {pipeline_mode = #tpu.pipeline_mode<synchronous>, transform_indices = @transform_10, window_bounds = array<i64: 8, 128>}, {transform_indices = @transform_11, window_bounds = array<i64: 8, 128>}]} {
    %c0 = arith.constant 0 : index
    %c0_0 = arith.constant 0 : index
    %c0_1 = arith.constant 0 : index
    %0 = vector.load %arg1[%c0, %c0_0, %c0_1] : memref<8x16x128xf32, #tpu.memory_space<vmem>>, vector<8x16x128xf32>
    %cst = arith.constant dense<0.000000e+00> : vector<8x128xf32>
    %1 = vector.multi_reduction <add>, %0, %cst [1] : vector<8x16x128xf32> to vector<8x128xf32>
    %cst_2 = arith.constant 1.600000e+01 : f32
    %2 = vector.broadcast %cst_2 : f32 to vector<8x128xf32>
    %3 = arith.divf %1, %2 : vector<8x128xf32>
    %c0_3 = arith.constant 0 : index
    %c0_4 = arith.constant 0 : index
    %4 = vector.load %arg2[%c0_3, %c0_4] : memref<1x128xf32, #tpu.memory_space<vmem>>, vector<1x128xf32>
    %5 = vector.broadcast %4 : vector<1x128xf32> to vector<8x128xf32>
    %6 = arith.addf %3, %5 : vector<8x128xf32>
    %c0_5 = arith.constant 0 : index
    %c0_6 = arith.constant 0 : index
    %7 = vector.load %arg3[%c0_5, %c0_6] : memref<16x128xf32, #tpu.memory_space<vmem>>, vector<16x128xf32>
    %8 = vector.shape_cast %7 : vector<16x128xf32> to vector<1x16x128xf32>
    %9 = vector.broadcast %8 : vector<1x16x128xf32> to vector<8x16x128xf32>
    %10 = arith.addf %0, %9 : vector<8x16x128xf32>
    %11 = vector.shape_cast %10 : vector<8x16x128xf32> to vector<128x128xf32>
    %c0_7 = arith.constant 0 : index
    %c0_8 = arith.constant 0 : index
    %12 = vector.load %arg4[%c0_7, %c0_8] : memref<128x128xf32, #tpu.memory_space<vmem>>, vector<128x128xf32>
    %cst_9 = arith.constant dense<0.000000e+00> : vector<8x128xf32>
    %13 = tpu.matmul %6, %12, %cst_9 {dimension_numbers = #tpu.dot_dimension_numbers<[1], [0], [0], [1], [0, 0, 1, 1], [], []>} : vector<8x128xf32>, vector<128x128xf32>, vector<8x128xf32> -> vector<8x128xf32>
    %c0_10 = arith.constant 0 : index
    %c0_11 = arith.constant 0 : index
    %14 = vector.load %arg5[%c0_10, %c0_11] : memref<1x128xf32, #tpu.memory_space<vmem>>, vector<1x128xf32>
    %15 = vector.broadcast %14 : vector<1x128xf32> to vector<8x128xf32>
    %16 = arith.addf %13, %15 : vector<8x128xf32>
    %cst_12 = arith.constant 2.500000e-01 : f32
    %17 = vector.broadcast %cst_12 : f32 to vector<8x128xf32>
    %18 = arith.mulf %16, %17 : vector<8x128xf32>
    %c0_13 = arith.constant 0 : index
    %c0_14 = arith.constant 0 : index
    %19 = vector.load %arg6[%c0_13, %c0_14] : memref<128x256xf32, #tpu.memory_space<vmem>>, vector<128x256xf32>
    %cst_15 = arith.constant dense<0.000000e+00> : vector<8x256xf32>
    %20 = tpu.matmul %6, %19, %cst_15 {dimension_numbers = #tpu.dot_dimension_numbers<[1], [0], [0], [1], [0, 0, 1, 1], [], []>} : vector<8x128xf32>, vector<128x256xf32>, vector<8x256xf32> -> vector<8x256xf32>
    %c0_16 = arith.constant 0 : index
    %c0_17 = arith.constant 0 : index
    %21 = vector.load %arg7[%c0_16, %c0_17] : memref<1x256xf32, #tpu.memory_space<vmem>>, vector<1x256xf32>
    %22 = vector.broadcast %21 : vector<1x256xf32> to vector<8x256xf32>
    %23 = arith.addf %20, %22 : vector<8x256xf32>
    %c0_18 = arith.constant 0 : index
    %c0_19 = arith.constant 0 : index
    %24 = vector.load %arg6[%c0_18, %c0_19] : memref<128x256xf32, #tpu.memory_space<vmem>>, vector<128x256xf32>
    %cst_20 = arith.constant dense<0.000000e+00> : vector<128x256xf32>
    %25 = tpu.matmul %11, %24, %cst_20 {dimension_numbers = #tpu.dot_dimension_numbers<[1], [0], [0], [1], [0, 0, 1, 1], [], []>} : vector<128x128xf32>, vector<128x256xf32>, vector<128x256xf32> -> vector<128x256xf32>
    %c0_21 = arith.constant 0 : index
    %c0_22 = arith.constant 0 : index
    %26 = vector.load %arg7[%c0_21, %c0_22] : memref<1x256xf32, #tpu.memory_space<vmem>>, vector<1x256xf32>
    %27 = vector.broadcast %26 : vector<1x256xf32> to vector<128x256xf32>
    %28 = arith.addf %25, %27 : vector<128x256xf32>
    %29 = vector.extract_strided_slice %23 {offsets = [0, 0], sizes = [8, 128], strides = [1, 1]} : vector<8x256xf32> to vector<8x128xf32>
    %30 = vector.extract_strided_slice %23 {offsets = [0, 128], sizes = [8, 128], strides = [1, 1]} : vector<8x256xf32> to vector<8x128xf32>
    %31 = vector.extract_strided_slice %28 {offsets = [0, 0], sizes = [128, 128], strides = [1, 1]} : vector<128x256xf32> to vector<128x128xf32>
    %32 = vector.extract_strided_slice %28 {offsets = [0, 128], sizes = [128, 128], strides = [1, 1]} : vector<128x256xf32> to vector<128x128xf32>
    %c0_23 = arith.constant 0 : index
    %c0_24 = arith.constant 0 : index
    %33 = vector.load %arg10[%c0_23, %c0_24] : memref<128x8xf32, #tpu.memory_space<vmem>>, vector<128x8xf32>
    %c0_25 = arith.constant 0 : index
    %c0_26 = arith.constant 0 : index
    %34 = vector.load %arg11[%c0_25, %c0_26] : memref<8x128xf32, #tpu.memory_space<vmem>>, vector<8x128xf32>
    %35 = vector.shape_cast %31 : vector<128x128xf32> to vector<8x16x128xf32>
    %36 = vector.shape_cast %18 : vector<8x128xf32> to vector<8x1x128xf32>
    %37 = vector.broadcast %36 : vector<8x1x128xf32> to vector<8x16x128xf32>
    %38 = arith.mulf %35, %37 : vector<8x16x128xf32>
    %39 = vector.shape_cast %38 : vector<8x16x128xf32> to vector<128x128xf32>
    %cst_27 = arith.constant dense<0.000000e+00> : vector<128x8xf32>
    %40 = tpu.matmul %39, %33, %cst_27 {dimension_numbers = #tpu.dot_dimension_numbers<[1], [0], [0], [1], [0, 0, 1, 1], [], []>} : vector<128x128xf32>, vector<128x8xf32>, vector<128x8xf32> -> vector<128x8xf32>
    %41 = vector.shape_cast %40 : vector<128x8xf32> to vector<8x16x8xf32>
    %42 = arith.mulf %29, %18 : vector<8x128xf32>
    %cst_28 = arith.constant dense<0.000000e+00> : vector<8x8xf32>
    %43 = tpu.matmul %42, %33, %cst_28 {dimension_numbers = #tpu.dot_dimension_numbers<[1], [0], [0], [1], [0, 0, 1, 1], [], []>} : vector<8x128xf32>, vector<128x8xf32>, vector<8x8xf32> -> vector<8x8xf32>
    %cst_29 = arith.constant dense<0xFF800000> : vector<8x8xf32>
    %44 = vector.multi_reduction <maximumf>, %41, %cst_29 [1] : vector<8x16x8xf32> to vector<8x8xf32>
    %45 = arith.maximumf %44, %43 : vector<8x8xf32>
    %46 = vector.shape_cast %45 : vector<8x8xf32> to vector<8x1x8xf32>
    %47 = vector.broadcast %46 : vector<8x1x8xf32> to vector<8x16x8xf32>
    %48 = arith.subf %41, %47 : vector<8x16x8xf32>
    %49 = math.exp %48 : vector<8x16x8xf32>
    %50 = arith.subf %43, %45 : vector<8x8xf32>
    %51 = math.exp %50 : vector<8x8xf32>
    %cst_30 = arith.constant dense<0.000000e+00> : vector<8x8xf32>
    %52 = vector.multi_reduction <add>, %49, %cst_30 [1] : vector<8x16x8xf32> to vector<8x8xf32>
    %53 = arith.addf %52, %51 : vector<8x8xf32>
    %cst_31 = arith.constant 1.000000e+00 : f32
    %54 = vector.broadcast %cst_31 : f32 to vector<8x8xf32>
    %55 = arith.divf %54, %53 : vector<8x8xf32>
    %56 = vector.shape_cast %55 : vector<8x8xf32> to vector<8x1x8xf32>
    %57 = vector.broadcast %56 : vector<8x1x8xf32> to vector<8x16x8xf32>
    %58 = arith.mulf %49, %57 : vector<8x16x8xf32>
    %59 = arith.mulf %51, %55 : vector<8x8xf32>
    %60 = vector.shape_cast %58 : vector<8x16x8xf32> to vector<128x8xf32>
    %cst_32 = arith.constant dense<0.000000e+00> : vector<128x128xf32>
    %61 = tpu.matmul %60, %34, %cst_32 {dimension_numbers = #tpu.dot_dimension_numbers<[1], [0], [0], [1], [0, 0, 1, 1], [], []>} : vector<128x8xf32>, vector<8x128xf32>, vector<128x128xf32> -> vector<128x128xf32>
    %62 = vector.shape_cast %61 : vector<128x128xf32> to vector<8x16x128xf32>
    %cst_33 = arith.constant dense<0.000000e+00> : vector<8x128xf32>
    %63 = tpu.matmul %59, %34, %cst_33 {dimension_numbers = #tpu.dot_dimension_numbers<[1], [0], [0], [1], [0, 0, 1, 1], [], []>} : vector<8x8xf32>, vector<8x128xf32>, vector<8x128xf32> -> vector<8x128xf32>
    %64 = vector.shape_cast %32 : vector<128x128xf32> to vector<8x16x128xf32>
    %65 = arith.mulf %62, %64 : vector<8x16x128xf32>
    %cst_34 = arith.constant dense<0.000000e+00> : vector<8x128xf32>
    %66 = vector.multi_reduction <add>, %65, %cst_34 [1] : vector<8x16x128xf32> to vector<8x128xf32>
    %67 = arith.mulf %63, %30 : vector<8x128xf32>
    %68 = arith.addf %66, %67 : vector<8x128xf32>
    %c0_35 = arith.constant 0 : index
    %c0_36 = arith.constant 0 : index
    %69 = vector.load %arg8[%c0_35, %c0_36] : memref<128x128xf32, #tpu.memory_space<vmem>>, vector<128x128xf32>
    %cst_37 = arith.constant dense<0.000000e+00> : vector<8x128xf32>
    %70 = tpu.matmul %68, %69, %cst_37 {dimension_numbers = #tpu.dot_dimension_numbers<[1], [0], [0], [1], [0, 0, 1, 1], [], []>} : vector<8x128xf32>, vector<128x128xf32>, vector<8x128xf32> -> vector<8x128xf32>
    %c0_38 = arith.constant 0 : index
    %c0_39 = arith.constant 0 : index
    %71 = vector.load %arg9[%c0_38, %c0_39] : memref<1x128xf32, #tpu.memory_space<vmem>>, vector<1x128xf32>
    %72 = vector.broadcast %71 : vector<1x128xf32> to vector<8x128xf32>
    %73 = arith.addf %70, %72 : vector<8x128xf32>
    %c0_40 = arith.constant 0 : index
    %c0_41 = arith.constant 0 : index
    %74 = vector.load %arg12[%c0_40, %c0_41] : memref<8x128xf32, #tpu.memory_space<vmem>>, vector<8x128xf32>
    tpu.vector_store %arg12[%c0_40, %c0_41], %73 {strides = array<i32>} : memref<8x128xf32, #tpu.memory_space<vmem>>, vector<8x128xf32>,
    return
  }
  func.func @transform_0(%arg0: i32) -> (i32, i32, i32) {
    %c0_i32 = arith.constant 0 : i32
    %c0_i32_0 = arith.constant 0 : i32
    %c0_i32_1 = arith.constant 0 : i32
    return %arg0, %c0_i32, %c0_i32_0 : i32, i32, i32
  }
  func.func @transform_1(%arg0: i32) -> (i32, i32) {
    %c0_i32 = arith.constant 0 : i32
    %c0_i32_0 = arith.constant 0 : i32
    %c0_i32_1 = arith.constant 0 : i32
    return %c0_i32, %c0_i32_0 : i32, i32
  }
  func.func @transform_2(%arg0: i32) -> (i32, i32) {
    %c0_i32 = arith.constant 0 : i32
    %c0_i32_0 = arith.constant 0 : i32
    %c0_i32_1 = arith.constant 0 : i32
    return %c0_i32, %c0_i32_0 : i32, i32
  }
  func.func @transform_3(%arg0: i32) -> (i32, i32) {
    %c0_i32 = arith.constant 0 : i32
    %c0_i32_0 = arith.constant 0 : i32
    %c0_i32_1 = arith.constant 0 : i32
    return %c0_i32, %c0_i32_0 : i32, i32
  }
  func.func @transform_4(%arg0: i32) -> (i32, i32) {
    %c0_i32 = arith.constant 0 : i32
    %c0_i32_0 = arith.constant 0 : i32
    %c0_i32_1 = arith.constant 0 : i32
    return %c0_i32, %c0_i32_0 : i32, i32
  }
  func.func @transform_5(%arg0: i32) -> (i32, i32) {
    %c0_i32 = arith.constant 0 : i32
    %c0_i32_0 = arith.constant 0 : i32
    %c0_i32_1 = arith.constant 0 : i32
    return %c0_i32, %c0_i32_0 : i32, i32
  }
  func.func @transform_6(%arg0: i32) -> (i32, i32) {
    %c0_i32 = arith.constant 0 : i32
    %c0_i32_0 = arith.constant 0 : i32
    %c0_i32_1 = arith.constant 0 : i32
    return %c0_i32, %c0_i32_0 : i32, i32
  }
  func.func @transform_7(%arg0: i32) -> (i32, i32) {
    %c0_i32 = arith.constant 0 : i32
    %c0_i32_0 = arith.constant 0 : i32
    %c0_i32_1 = arith.constant 0 : i32
    return %c0_i32, %c0_i32_0 : i32, i32
  }
  func.func @transform_8(%arg0: i32) -> (i32, i32) {
    %c0_i32 = arith.constant 0 : i32
    %c0_i32_0 = arith.constant 0 : i32
    %c0_i32_1 = arith.constant 0 : i32
    return %c0_i32, %c0_i32_0 : i32, i32
  }
  func.func @transform_9(%arg0: i32) -> (i32, i32) {
    %c0_i32 = arith.constant 0 : i32
    %c0_i32_0 = arith.constant 0 : i32
    %c0_i32_1 = arith.constant 0 : i32
    return %c0_i32, %c0_i32_0 : i32, i32
  }
  func.func @transform_10(%arg0: i32) -> (i32, i32) {
    %c0_i32 = arith.constant 0 : i32
    %c0_i32_0 = arith.constant 0 : i32
    %c0_i32_1 = arith.constant 0 : i32
    return %c0_i32, %c0_i32_0 : i32, i32
  }
  func.func @transform_11(%arg0: i32) -> (i32, i32) {
    %c0_i32 = arith.constant 0 : i32
    %c0_i32_0 = arith.constant 0 : i32
    return %arg0, %c0_i32 : i32, i32
  }
}

</mosaic_0001>

<llo_original>
// kernel: tpu_custom_call.1
$region0: #{tpu_custom_call.1}
  #allocation0 [shape = 'u32[]', space=smem, size = 0x4, offset = 0x4, fixed_abs, tag = 'smem constant byte address 0x4 - core index']
  #allocation1 [shape = 'u32[144,128]{1,0:T(1,128)}', space=vmem, size = 0x12000, scoped, tag = 'internal scratch']
  %s0 = inlined_call_operand.hbm [shape: f32[16,16,128], index: 0, kind: input, shape index: {}]
  %s1 = inlined_call_operand.vmem [shape: f32[1,128], index: 1, kind: input, shape index: {}]
  %s2 = inlined_call_operand.hbm [shape: f32[16,128], index: 2, kind: input, shape index: {}]
  %s3 = inlined_call_operand.vmem [shape: f32[128,128], index: 3, kind: input, shape index: {}]
  %s4 = inlined_call_operand.vmem [shape: f32[1,128], index: 4, kind: input, shape index: {}]
  %s5 = inlined_call_operand.hbm [shape: f32[128,256], index: 5, kind: input, shape index: {}]
  %s6 = inlined_call_operand.vmem [shape: f32[1,256], index: 6, kind: input, shape index: {}]
  %s7 = inlined_call_operand.hbm [shape: f32[128,128], index: 7, kind: input, shape index: {}]
  %s8 = inlined_call_operand.vmem [shape: f32[1,128], index: 8, kind: input, shape index: {}]
  %s9 = inlined_call_operand.vmem [shape: f32[128,8], index: 9, kind: input, shape index: {}]
  %s10 = inlined_call_operand.vmem [shape: f32[8,128], index: 10, kind: input, shape index: {}]
  %s11 = inlined_call_operand.hbm [shape: f32[16,128], index: 11, kind: output, shape index: {}]
  %s12 = sld [smem:[#allocation0]]
  $region93: #{tpu_custom_call.1} parent=0
    _
  %s14 = ssub.s32 1, %s12
  %s15 = scalar_select 0, %s14, %s12
  $region1: #{tpu_custom_call.1} parent=0
    #allocation2 [shape = 'u8[131072]{0}', space=vmem, size = 0x20000, scoped, tag = 'input window, operand 0']
    #allocation3 [shape = 's32[2]{0}', space=sflag, size = 0x8, scoped, tag = 'scoped memory for tpu_custom_call.1']
    #allocation4 [shape = 's32[2]{0}', space=sflag, size = 0x8, scoped, tag = 'scoped memory for tpu_custom_call.1']
    #allocation5 [shape = 'u8[8192]{0}', space=vmem, size = 0x2000, scoped, tag = 'input window, operand 2, single buffered']
    #allocation6 [shape = 's32[1]{0}', space=sflag, size = 0x4, scoped, tag = 'scoped memory for tpu_custom_call.1']
    #allocation7 [shape = 'u8[131072]{0}', space=vmem, size = 0x20000, scoped, tag = 'input window, operand 5, single buffered']
    #allocation8 [shape = 'u8[65536]{0}', space=vmem, size = 0x10000, scoped, tag = 'input window, operand 7, single buffered']
    #allocation9 [shape = 's32[1]{0}', space=sflag, size = 0x4, scoped, tag = 'scoped memory for tpu_custom_call.1']
    #allocation10 [shape = 'u8[8192]{0}', space=vmem, size = 0x2000, scoped, tag = 'output window, operand 0']
    %16 = vsyncpa [#allocation3], 0
    %s17 = scalar_lea.sflag [#allocation3], 1
    %18 = vsyncpa %s17, 0
    %19 = vsyncpa [#allocation6], 0
    %20 = vsyncpa [#allocation9], 0
    %21 = vsyncpa [#allocation4], 0
    %s22 = scalar_lea.sflag [#allocation4], 1
    %23 = vsyncpa %s22, 0
    loop: start=0, step=1, limit=4
    $region2: #{tpu_custom_call.1} parent=1 // loop_pre_header
      _
    $region3: #{tpu_custom_call.1} parent=1 // loop_header
      %s25 = sphi 0, %s29
      %p26 = scmp.ge.s32.totalorder %s25, 4
      %s35 = sphi 0, %s37
      %s38 = sphi 0, %s35
      %s39 = sphi 0, %s38
      %s55 = sphi 0, %s39
      %s59 = sphi 0, %s59
      %s61 = sphi 0, %s59
      %s62 = sphi 0, %s61
      %s76 = sphi 0, %s62
      %s80 = sphi 0, %s80
      %s82 = sphi 0, %s80
      %s83 = sphi 0, %s82
      %s97 = sphi 0, %s83
      %s101 = sphi 0, %s101
      %s103 = sphi 0, %s101
      %s104 = sphi 0, %s103
      %s118 = sphi 0, %s104
      %s122 = sphi 0, %s122
      %s124 = sphi 0, %s122
      %s125 = sphi 0, %s124
      %s139 = sphi 0, %s125
      %s143 = sphi 0, %s143
      %s145 = sphi 0, %s143
      %s146 = sphi 0, %s145
      %s160 = sphi 0, %s146
      %s164 = sphi 0, %s164
      %s166 = sphi 0, %s164
      %s167 = sphi 0, %s166
      %s181 = sphi 0, %s167
      %s185 = sphi 0, %s185
      %s187 = sphi 0, %s185
      %s188 = sphi 0, %s187
      %s202 = sphi 0, %s188
      %s206 = sphi 0, %s206
      %s208 = sphi 0, %s206
      %s209 = sphi 0, %s208
      %s223 = sphi 0, %s209
      %s227 = sphi 0, %s227
      %s229 = sphi 0, %s227
      %s230 = sphi 0, %s229
      %s244 = sphi 0, %s230
      %s248 = sphi 0, %s248
      %s250 = sphi 0, %s248
      %s251 = sphi 0, %s250
      %s265 = sphi 0, %s251
      %s271 = sphi 0, %s273
      %s274 = sphi 0, %s271
      %s275 = sphi 0, %s274
      %s291 = sphi 0, %s275
    $region4: #{tpu_custom_call.1} parent=1 // loop_header_branch
      %28 = sbr.rel (%p26) target = $region8
    $region5: #{tpu_custom_call.1} parent=1 // loop_body
      %s30 = ssub.s32 %s25, 1
      %s31 = ssub.s32 %s25, 2
      %s32 = sadd.s32 %s25, 1
      %s33 = ssub.s32 %s25, %s32
      %p34 = scmp.eq.s32.totalorder %s33, 0
      %s36 = sadd.s32 %s35, 1
      %s37 = scalar_select %p34, %s35, %s36
      %p40 = pneg %p34
      %p41 = scmp.eq.s32.totalorder %s25, 1
      %p42 = por %p40, %p41
      %p43 = scmp.ne.s32.totalorder %s35, %s38
      %p44 = scmp.eq.s32.totalorder %s25, 0
      %p45 = por %p43, %p44
      %p46 = scmp.ne.s32.totalorder %s35, %s38
      %p47 = scmp.eq.s32.totalorder %s30, 1
      %p48 = por %p46, %p47
      %p49 = scmp.ne.s32.totalorder %s38, %s39
      %p50 = scmp.eq.s32.totalorder %s30, 0
      %p51 = por %p49, %p50
      %p52 = scmp.ne.s32.totalorder %s38, %s39
      %p53 = scmp.eq.s32.totalorder %s31, 1
      %p54 = por %p52, %p53
      %p56 = scmp.ne.s32.totalorder %s39, %s55
      %p57 = scmp.eq.s32.totalorder %s31, 0
      %p58 = por %p56, %p57
      %s60 = sadd.s32 %s59, 1
      %p63 = scmp.eq.s32.totalorder %s25, 1
      %p64 = scmp.ne.s32.totalorder %s59, %s61
      %p65 = scmp.eq.s32.totalorder %s25, 0
      %p66 = por %p64, %p65
      %p67 = scmp.ne.s32.totalorder %s59, %s61
      %p68 = scmp.eq.s32.totalorder %s30, 1
      %p69 = por %p67, %p68
      %p70 = scmp.ne.s32.totalorder %s61, %s62
      %p71 = scmp.eq.s32.totalorder %s30, 0
      %p72 = por %p70, %p71
      %p73 = scmp.ne.s32.totalorder %s61, %s62
      %p74 = scmp.eq.s32.totalorder %s31, 1
      %p75 = por %p73, %p74
      %p77 = scmp.ne.s32.totalorder %s62, %s76
      %p78 = scmp.eq.s32.totalorder %s31, 0
      %p79 = por %p77, %p78
      %s81 = sadd.s32 %s80, 1
      %p84 = scmp.eq.s32.totalorder %s25, 1
      %p85 = scmp.ne.s32.totalorder %s80, %s82
      %p86 = scmp.eq.s32.totalorder %s25, 0
      %p87 = por %p85, %p86
      %p88 = scmp.ne.s32.totalorder %s80, %s82
      %p89 = scmp.eq.s32.totalorder %s30, 1
      %p90 = por %p88, %p89
      %p91 = scmp.ne.s32.totalorder %s82, %s83
      %p92 = scmp.eq.s32.totalorder %s30, 0
      %p93 = por %p91, %p92
      %p94 = scmp.ne.s32.totalorder %s82, %s83
      %p95 = scmp.eq.s32.totalorder %s31, 1
      %p96 = por %p94, %p95
      %p98 = scmp.ne.s32.totalorder %s83, %s97
      %p99 = scmp.eq.s32.totalorder %s31, 0
      %p100 = por %p98, %p99
      %s102 = sadd.s32 %s101, 1
      %p105 = scmp.eq.s32.totalorder %s25, 1
      %p106 = scmp.ne.s32.totalorder %s101, %s103
      %p107 = scmp.eq.s32.totalorder %s25, 0
      %p108 = por %p106, %p107
      %p109 = scmp.ne.s32.totalorder %s101, %s103
      %p110 = scmp.eq.s32.totalorder %s30, 1
      %p111 = por %p109, %p110
      %p112 = scmp.ne.s32.totalorder %s103, %s104
      %p113 = scmp.eq.s32.totalorder %s30, 0
      %p114 = por %p112, %p113
      %p115 = scmp.ne.s32.totalorder %s103, %s104
      %p116 = scmp.eq.s32.totalorder %s31, 1
      %p117 = por %p115, %p116
      %p119 = scmp.ne.s32.totalorder %s104, %s118
      %p120 = scmp.eq.s32.totalorder %s31, 0
      %p121 = por %p119, %p120
      %s123 = sadd.s32 %s122, 1
      %p126 = scmp.eq.s32.totalorder %s25, 1
      %p127 = scmp.ne.s32.totalorder %s122, %s124
      %p128 = scmp.eq.s32.totalorder %s25, 0
      %p129 = por %p127, %p128
      %p130 = scmp.ne.s32.totalorder %s122, %s124
      %p131 = scmp.eq.s32.totalorder %s30, 1
      %p132 = por %p130, %p131
      %p133 = scmp.ne.s32.totalorder %s124, %s125
      %p134 = scmp.eq.s32.totalorder %s30, 0
      %p135 = por %p133, %p134
      %p136 = scmp.ne.s32.totalorder %s124, %s125
      %p137 = scmp.eq.s32.totalorder %s31, 1
      %p138 = por %p136, %p137
      %p140 = scmp.ne.s32.totalorder %s125, %s139
      %p141 = scmp.eq.s32.totalorder %s31, 0
      %p142 = por %p140, %p141
      %s144 = sadd.s32 %s143, 1
      %p147 = scmp.eq.s32.totalorder %s25, 1
      %p148 = scmp.ne.s32.totalorder %s143, %s145
      %p149 = scmp.eq.s32.totalorder %s25, 0
      %p150 = por %p148, %p149
      %p151 = scmp.ne.s32.totalorder %s143, %s145
      %p152 = scmp.eq.s32.totalorder %s30, 1
      %p153 = por %p151, %p152
      %p154 = scmp.ne.s32.totalorder %s145, %s146
      %p155 = scmp.eq.s32.totalorder %s30, 0
      %p156 = por %p154, %p155
      %p157 = scmp.ne.s32.totalorder %s145, %s146
      %p158 = scmp.eq.s32.totalorder %s31, 1
      %p159 = por %p157, %p158
      %p161 = scmp.ne.s32.totalorder %s146, %s160
      %p162 = scmp.eq.s32.totalorder %s31, 0
      %p163 = por %p161, %p162
      %s165 = sadd.s32 %s164, 1
      %p168 = scmp.eq.s32.totalorder %s25, 1
      %p169 = scmp.ne.s32.totalorder %s164, %s166
      %p170 = scmp.eq.s32.totalorder %s25, 0
      %p171 = por %p169, %p170
      %p172 = scmp.ne.s32.totalorder %s164, %s166
      %p173 = scmp.eq.s32.totalorder %s30, 1
      %p174 = por %p172, %p173
      %p175 = scmp.ne.s32.totalorder %s166, %s167
      %p176 = scmp.eq.s32.totalorder %s30, 0
      %p177 = por %p175, %p176
      %p178 = scmp.ne.s32.totalorder %s166, %s167
      %p179 = scmp.eq.s32.totalorder %s31, 1
      %p180 = por %p178, %p179
      %p182 = scmp.ne.s32.totalorder %s167, %s181
      %p183 = scmp.eq.s32.totalorder %s31, 0
      %p184 = por %p182, %p183
      %s186 = sadd.s32 %s185, 1
      %p189 = scmp.eq.s32.totalorder %s25, 1
      %p190 = scmp.ne.s32.totalorder %s185, %s187
      %p191 = scmp.eq.s32.totalorder %s25, 0
      %p192 = por %p190, %p191
      %p193 = scmp.ne.s32.totalorder %s185, %s187
      %p194 = scmp.eq.s32.totalorder %s30, 1
      %p195 = por %p193, %p194
      %p196 = scmp.ne.s32.totalorder %s187, %s188
      %p197 = scmp.eq.s32.totalorder %s30, 0
      %p198 = por %p196, %p197
      %p199 = scmp.ne.s32.totalorder %s187, %s188
      %p200 = scmp.eq.s32.totalorder %s31, 1
      %p201 = por %p199, %p200
      %p203 = scmp.ne.s32.totalorder %s188, %s202
      %p204 = scmp.eq.s32.totalorder %s31, 0
      %p205 = por %p203, %p204
      %s207 = sadd.s32 %s206, 1
      %p210 = scmp.eq.s32.totalorder %s25, 1
      %p211 = scmp.ne.s32.totalorder %s206, %s208
      %p212 = scmp.eq.s32.totalorder %s25, 0
      %p213 = por %p211, %p212
      %p214 = scmp.ne.s32.totalorder %s206, %s208
      %p215 = scmp.eq.s32.totalorder %s30, 1
      %p216 = por %p214, %p215
      %p217 = scmp.ne.s32.totalorder %s208, %s209
      %p218 = scmp.eq.s32.totalorder %s30, 0
      %p219 = por %p217, %p218
      %p220 = scmp.ne.s32.totalorder %s208, %s209
      %p221 = scmp.eq.s32.totalorder %s31, 1
      %p222 = por %p220, %p221
      %p224 = scmp.ne.s32.totalorder %s209, %s223
      %p225 = scmp.eq.s32.totalorder %s31, 0
      %p226 = por %p224, %p225
      %s228 = sadd.s32 %s227, 1
      %p231 = scmp.eq.s32.totalorder %s25, 1
      %p232 = scmp.ne.s32.totalorder %s227, %s229
      %p233 = scmp.eq.s32.totalorder %s25, 0
      %p234 = por %p232, %p233
      %p235 = scmp.ne.s32.totalorder %s227, %s229
      %p236 = scmp.eq.s32.totalorder %s30, 1
      %p237 = por %p235, %p236
      %p238 = scmp.ne.s32.totalorder %s229, %s230
      %p239 = scmp.eq.s32.totalorder %s30, 0
      %p240 = por %p238, %p239
      %p241 = scmp.ne.s32.totalorder %s229, %s230
      %p242 = scmp.eq.s32.totalorder %s31, 1
      %p243 = por %p241, %p242
      %p245 = scmp.ne.s32.totalorder %s230, %s244
      %p246 = scmp.eq.s32.totalorder %s31, 0
      %p247 = por %p245, %p246
      %s249 = sadd.s32 %s248, 1
      %p252 = scmp.eq.s32.totalorder %s25, 1
      %p253 = scmp.ne.s32.totalorder %s248, %s250
      %p254 = scmp.eq.s32.totalorder %s25, 0
      %p255 = por %p253, %p254
      %p256 = scmp.ne.s32.totalorder %s248, %s250
      %p257 = scmp.eq.s32.totalorder %s30, 1
      %p258 = por %p256, %p257
      %p259 = scmp.ne.s32.totalorder %s250, %s251
      %p260 = scmp.eq.s32.totalorder %s30, 0
      %p261 = por %p259, %p260
      %p262 = scmp.ne.s32.totalorder %s250, %s251
      %p263 = scmp.eq.s32.totalorder %s31, 1
      %p264 = por %p262, %p263
      %p266 = scmp.ne.s32.totalorder %s251, %s265
      %p267 = scmp.eq.s32.totalorder %s31, 0
      %p268 = por %p266, %p267
      %s269 = ssub.s32 %s25, %s32
      %p270 = scmp.eq.s32.totalorder %s269, 0
      %s272 = sadd.s32 %s271, 1
      %s273 = scalar_select %p270, %s271, %s272
      %p276 = pneg %p270
      %p277 = scmp.eq.s32.totalorder %s25, 1
      %p278 = por %p276, %p277
      %p279 = scmp.ne.s32.totalorder %s271, %s274
      %p280 = scmp.eq.s32.totalorder %s25, 0
      %p281 = por %p279, %p280
      %p282 = scmp.ne.s32.totalorder %s271, %s274
      %p283 = scmp.eq.s32.totalorder %s30, 1
      %p284 = por %p282, %p283
      %p285 = scmp.ne.s32.totalorder %s274, %s275
      %p286 = scmp.eq.s32.totalorder %s30, 0
      %p287 = por %p285, %p286
      %p288 = scmp.ne.s32.totalorder %s274, %s275
      %p289 = scmp.eq.s32.totalorder %s31, 1
      %p290 = por %p288, %p289
      %p292 = scmp.ne.s32.totalorder %s275, %s291
      %p293 = scmp.eq.s32.totalorder %s31, 0
      %p294 = por %p292, %p293
      %p295 = scmp.le.s32.totalorder 1, %s25
      %p296 = scmp.lt.s32.totalorder %s25, 3
      %p297 = pnand %p295, %p296
      %p298 = pneg %p297
      // Predicated region
      $region9: #{tpu_custom_call.1} parent=5 // pred_check
        _
      $region10: #{tpu_custom_call.1} parent=5 // pred_check_branch
        %300 = sbr.rel (%p297) target = $region12
      $region11: #{tpu_custom_call.1} parent=5 // pred_region
        %s301 = ssub.s32 %s25, 1
        // Predicated region
        $region13: #{tpu_custom_call.1} parent=11 // pred_check
          %p302 = pneg %p72
        $region14: #{tpu_custom_call.1} parent=11 // pred_check_branch
          %304 = sbr.rel (%p302) target = $region16
        $region15: #{tpu_custom_call.1} parent=11 // pred_region
          _
        $region16: #{tpu_custom_call.1} parent=11 // pred_fallthru
          _
        // Predicated region
        $region17: #{tpu_custom_call.1} parent=11 // pred_check
          %p305 = pneg %p93
        $region18: #{tpu_custom_call.1} parent=11 // pred_check_branch
          %307 = sbr.rel (%p305) target = $region20
        $region19: #{tpu_custom_call.1} parent=11 // pred_region
          %s309 = ssub.s32 256, 256
          %310 = vsyncadd [#allocation6], %s309
          %s311 = sshll.u32 [#allocation5], 4
          %s312 = int_to_ptr.vmem [resolvable:$true] %s311
          %317 = dma.hbm_to_vmem [thread:$0]  %s2, 256, %s312, [#allocation6], 128, 128, 8
        $region20: #{tpu_custom_call.1} parent=11 // pred_fallthru
          _
        // Predicated region
        $region21: #{tpu_custom_call.1} parent=11 // pred_check
          %p318 = pneg %p114
        $region22: #{tpu_custom_call.1} parent=11 // pred_check_branch
          %320 = sbr.rel (%p318) target = $region24
        $region23: #{tpu_custom_call.1} parent=11 // pred_region
          _
        $region24: #{tpu_custom_call.1} parent=11 // pred_fallthru
          _
        // Predicated region
        $region25: #{tpu_custom_call.1} parent=11 // pred_check
          %p321 = pneg %p135
        $region26: #{tpu_custom_call.1} parent=11 // pred_check_branch
          %323 = sbr.rel (%p321) target = $region28
        $region27: #{tpu_custom_call.1} parent=11 // pred_region
          _
        $region28: #{tpu_custom_call.1} parent=11 // pred_fallthru
          _
        // Predicated region
        $region29: #{tpu_custom_call.1} parent=11 // pred_check
          %p324 = pneg %p156
        $region30: #{tpu_custom_call.1} parent=11 // pred_check_branch
          %326 = sbr.rel (%p324) target = $region32
        $region31: #{tpu_custom_call.1} parent=11 // pred_region
          %s328 = ssub.s32 4096, 4096
          %329 = vsyncadd [#allocation6], %s328
          %s330 = sshll.u32 [#allocation7], 4
          %s331 = int_to_ptr.vmem [resolvable:$true] %s330
          %336 = dma.hbm_to_vmem [thread:$0]  %s5, 4096, %s331, [#allocation6], 256, 256, 16
        $region32: #{tpu_custom_call.1} parent=11 // pred_fallthru
          _
        // Predicated region
        $region33: #{tpu_custom_call.1} parent=11 // pred_check
          %p337 = pneg %p177
        $region34: #{tpu_custom_call.1} parent=11 // pred_check_branch
          %339 = sbr.rel (%p337) target = $region36
        $region35: #{tpu_custom_call.1} parent=11 // pred_region
          _
        $region36: #{tpu_custom_call.1} parent=11 // pred_fallthru
          _
        // Predicated region
        $region37: #{tpu_custom_call.1} parent=11 // pred_check
          %p340 = pneg %p198
        $region38: #{tpu_custom_call.1} parent=11 // pred_check_branch
          %342 = sbr.rel (%p340) target = $region40
        $region39: #{tpu_custom_call.1} parent=11 // pred_region
          %s344 = ssub.s32 2048, 2048
          %345 = vsyncadd [#allocation9], %s344
          %s346 = sshll.u32 [#allocation8], 4
          %s347 = int_to_ptr.vmem [resolvable:$true] %s346
          %352 = dma.hbm_to_vmem [thread:$0]  %s7, 2048, %s347, [#allocation9], 128, 128, 8
        $region40: #{tpu_custom_call.1} parent=11 // pred_fallthru
          _
        // Predicated region
        $region41: #{tpu_custom_call.1} parent=11 // pred_check
          %p353 = pneg %p219
        $region42: #{tpu_custom_call.1} parent=11 // pred_check_branch
          %355 = sbr.rel (%p353) target = $region44
        $region43: #{tpu_custom_call.1} parent=11 // pred_region
          _
        $region44: #{tpu_custom_call.1} parent=11 // pred_fallthru
          _
        // Predicated region
        $region45: #{tpu_custom_call.1} parent=11 // pred_check
          %p356 = pneg %p240
        $region46: #{tpu_custom_call.1} parent=11 // pred_check_branch
          %358 = sbr.rel (%p356) target = $region48
        $region47: #{tpu_custom_call.1} parent=11 // pred_region
          _
        $region48: #{tpu_custom_call.1} parent=11 // pred_fallthru
          _
        // Predicated region
        $region49: #{tpu_custom_call.1} parent=11 // pred_check
          %p359 = pneg %p261
        $region50: #{tpu_custom_call.1} parent=11 // pred_check_branch
          %361 = sbr.rel (%p359) target = $region52
        $region51: #{tpu_custom_call.1} parent=11 // pred_region
          _
        $region52: #{tpu_custom_call.1} parent=11 // pred_fallthru
          _
      $region12: #{tpu_custom_call.1} parent=5 // pred_fallthru
        _
      %p362 = scmp.lt.s32.totalorder %s25, 2
      // Predicated region
      $region53: #{tpu_custom_call.1} parent=5 // pred_check
        %p363 = pneg %p362
      $region54: #{tpu_custom_call.1} parent=5 // pred_check_branch
        %365 = sbr.rel (%p363) target = $region56
      $region55: #{tpu_custom_call.1} parent=5 // pred_region
        // Predicated region
        $region57: #{tpu_custom_call.1} parent=55 // pred_check
          %p366 = pneg %p45
        $region58: #{tpu_custom_call.1} parent=55 // pred_check_branch
          %368 = sbr.rel (%p366) target = $region60
        $region59: #{tpu_custom_call.1} parent=55 // pred_region
          %s369 = sand.u32 %s35, 1
          %s370 = scalar_lea.sflag [#allocation3], %s369
          %s371 = sand.u32 %s35, 1
          %s372 = smul.addr %s371, 128
          %s373 = scalar_lea.vmem [#allocation2], %s372
          %s374 = smul.u32 8, %s25
          %s376 = ssub.s32 2048, 2048
          %377 = vsyncadd %s370, %s376
          %s378 = smul.addr %s374, 2
          %s379 = smul.addr %s378, 128
          %s380 = scalar_lea.hbm %s0, %s379
          %s381 = sshll.u32 %s373, 4
          %s382 = int_to_ptr.vmem [resolvable:$true] %s381
          %387 = dma.hbm_to_vmem [thread:$0]  %s380, 2048, %s382, %s370, 128, 128, 8
        $region60: #{tpu_custom_call.1} parent=55 // pred_fallthru
          _
      $region56: #{tpu_custom_call.1} parent=5 // pred_fallthru
        _
      %p388 = scmp.le.s32.totalorder 1, %s25
      %p389 = scmp.lt.s32.totalorder %s25, 3
      %p390 = pnand %p388, %p389
      %p391 = pneg %p390
      // Predicated region
      $region61: #{tpu_custom_call.1} parent=5 // pred_check
        _
      $region62: #{tpu_custom_call.1} parent=5 // pred_check_branch
        %393 = sbr.rel (%p390) target = $region64
      $region63: #{tpu_custom_call.1} parent=5 // pred_region
        %s394 = ssub.s32 %s25, 1
        %s395 = sand.u32 %s38, 1
        %s396 = scalar_lea.sflag [#allocation3], %s395
        %s397 = sand.u32 %s38, 1
        %s398 = smul.addr %s397, 128
        %s399 = scalar_lea.vmem [#allocation2], %s398
        // Predicated region
        $region65: #{tpu_custom_call.1} parent=63 // pred_check
          %p400 = pneg %p51
        $region66: #{tpu_custom_call.1} parent=63 // pred_check_branch
          %402 = sbr.rel (%p400) target = $region68
        $region67: #{tpu_custom_call.1} parent=63 // pred_region
          %403 = dma.done %s396, 2048
        $region68: #{tpu_custom_call.1} parent=63 // pred_fallthru
          _
        // Predicated region
        $region69: #{tpu_custom_call.1} parent=63 // pred_check
          %p404 = pneg %p93
        $region70: #{tpu_custom_call.1} parent=63 // pred_check_branch
          %406 = sbr.rel (%p404) target = $region72
        $region71: #{tpu_custom_call.1} parent=63 // pred_region
          %407 = dma.done [#allocation6], 256
        $region72: #{tpu_custom_call.1} parent=63 // pred_fallthru
          _
        // Predicated region
        $region73: #{tpu_custom_call.1} parent=63 // pred_check
          %p408 = pneg %p156
        $region74: #{tpu_custom_call.1} parent=63 // pred_check_branch
          %410 = sbr.rel (%p408) target = $region76
        $region75: #{tpu_custom_call.1} parent=63 // pred_region
          %411 = dma.done [#allocation6], 4096
        $region76: #{tpu_custom_call.1} parent=63 // pred_fallthru
          _
        // Predicated region
        $region77: #{tpu_custom_call.1} parent=63 // pred_check
          %p412 = pneg %p198
        $region78: #{tpu_custom_call.1} parent=63 // pred_check_branch
          %414 = sbr.rel (%p412) target = $region80
        $region79: #{tpu_custom_call.1} parent=63 // pred_region
          %415 = dma.done [#allocation9], 2048
        $region80: #{tpu_custom_call.1} parent=63 // pred_fallthru
          _
        %s416 = sand.u32 %s38, 1
        %s417 = scalar_lea.sflag [#allocation3], %s416
        %s418 = sand.u32 %s38, 1
        %s419 = smul.addr %s418, 128
        %s420 = scalar_lea.vmem [#allocation2], %s419
        %p421 = pneg %p51
        %p422 = pneg %p48
        %p423 = pneg %p72
        %p424 = pneg %p69
        %p425 = pneg %p93
        %p426 = pneg %p90
        %p427 = pneg %p114
        %p428 = pneg %p111
        %p429 = pneg %p135
        %p430 = pneg %p132
        %p431 = pneg %p156
        %p432 = pneg %p153
        %p433 = pneg %p177
        %p434 = pneg %p174
        %p435 = pneg %p198
        %p436 = pneg %p195
        %p437 = pneg %p219
        %p438 = pneg %p216
        %p439 = pneg %p240
        %p440 = pneg %p237
        %p441 = pneg %p261
        %p442 = pneg %p258
        %p443 = pneg %p287
        %p444 = pneg %p284
        %s445 = sand.u32 %s274, 1
        %s446 = scalar_lea.sflag [#allocation4], %s445
        %s447 = sand.u32 %s274, 1
        %s448 = smul.addr %s447, 8
        %s449 = scalar_lea.vmem [#allocation10], %s448
        %s450 = smul.u32 8, %s30
        %v451 = vld [vmem:[%s399] sm:$0xff]
        %v452 = vld [vmem:[%s399 + $0x8] sm:$0xff]
        %v453 = vld [vmem:[%s399 + $0x10] sm:$0xff]
        %v454 = vld [vmem:[%s399 + $0x18] sm:$0xff]
        %v455 = vld [vmem:[%s399 + $0x20] sm:$0xff]
        %v456 = vld [vmem:[%s399 + $0x28] sm:$0xff]
        %v457 = vld [vmem:[%s399 + $0x30] sm:$0xff]
        %v458 = vld [vmem:[%s399 + $0x38] sm:$0xff]
        %v459 = vld [vmem:[%s399 + $0x40] sm:$0xff]
        %v460 = vld [vmem:[%s399 + $0x48] sm:$0xff]
        %v461 = vld [vmem:[%s399 + $0x50] sm:$0xff]
        %v462 = vld [vmem:[%s399 + $0x58] sm:$0xff]
        %v463 = vld [vmem:[%s399 + $0x60] sm:$0xff]
        %v464 = vld [vmem:[%s399 + $0x68] sm:$0xff]
        %v465 = vld [vmem:[%s399 + $0x70] sm:$0xff]
        %v466 = vld [vmem:[%s399 + $0x78] sm:$0xff]
        %v467 = vadd.f32 %v451, %v452
        %v468 = vrot.slane %v467, 4
        %v469 = vadd.f32 %v467, %v468
        %v470 = vrot.slane %v469, 2
        %v471 = vadd.f32 %v469, %v470
        %v472 = vrot.slane %v471, 1
        %v473 = vadd.f32 %v471, %v472
        %v474 = vadd.f32 %v453, %v454
        %v475 = vrot.slane %v474, 4
        %v476 = vadd.f32 %v474, %v475
        %v477 = vrot.slane %v476, 2
        %v478 = vadd.f32 %v476, %v477
        %v479 = vrot.slane %v478, 1
        %v480 = vadd.f32 %v478, %v479
        %v481 = vadd.f32 %v455, %v456
        %v482 = vrot.slane %v481, 4
        %v483 = vadd.f32 %v481, %v482
        %v484 = vrot.slane %v483, 2
        %v485 = vadd.f32 %v483, %v484
        %v486 = vrot.slane %v485, 1
        %v487 = vadd.f32 %v485, %v486
        %v488 = vadd.f32 %v457, %v458
        %v489 = vrot.slane %v488, 4
        %v490 = vadd.f32 %v488, %v489
        %v491 = vrot.slane %v490, 2
        %v492 = vadd.f32 %v490, %v491
        %v493 = vrot.slane %v492, 1
        %v494 = vadd.f32 %v492, %v493
        %v495 = vadd.f32 %v459, %v460
        %v496 = vrot.slane %v495, 4
        %v497 = vadd.f32 %v495, %v496
        %v498 = vrot.slane %v497, 2
        %v499 = vadd.f32 %v497, %v498
        %v500 = vrot.slane %v499, 1
        %v501 = vadd.f32 %v499, %v500
        %v502 = vadd.f32 %v461, %v462
        %v503 = vrot.slane %v502, 4
        %v504 = vadd.f32 %v502, %v503
        %v505 = vrot.slane %v504, 2
        %v506 = vadd.f32 %v504, %v505
        %v507 = vrot.slane %v506, 1
        %v508 = vadd.f32 %v506, %v507
        %v509 = vadd.f32 %v463, %v464
        %v510 = vrot.slane %v509, 4
        %v511 = vadd.f32 %v509, %v510
        %v512 = vrot.slane %v511, 2
        %v513 = vadd.f32 %v511, %v512
        %v514 = vrot.slane %v513, 1
        %v515 = vadd.f32 %v513, %v514
        %v516 = vadd.f32 %v465, %v466
        %v517 = vrot.slane %v516, 4
        %v518 = vadd.f32 %v516, %v517
        %v519 = vrot.slane %v518, 2
        %v520 = vadd.f32 %v518, %v519
        %v521 = vrot.slane %v520, 1
        %v522 = vadd.f32 %v520, %v521
        %v523 = vrcp.pop 16.0
        %v524 = vmul.f32 %v473, %v523
        %v525 = vmul.f32 %v480, %v523
        %v526 = vmul.f32 %v487, %v523
        %v527 = vmul.f32 %v494, %v523
        %v528 = vmul.f32 %v501, %v523
        %v529 = vmul.f32 %v508, %v523
        %v530 = vmul.f32 %v515, %v523
        %v531 = vmul.f32 %v522, %v523
        %v532 = vld [vmem:[%s1] sm:$0x1]
        %v534 = vlaneseq
        %v535 = vshrl.u32 %v534, 7
        %v536 = vsub.s32 0, %v535
        %v537 = vrot.slane %v532, %v536
        %v539 = vadd.f32 %v524, %v537
        %v540 = vadd.f32 %v525, %v537
        %v541 = vadd.f32 %v526, %v537
        %v542 = vadd.f32 %v527, %v537
        %v543 = vadd.f32 %v528, %v537
        %v544 = vadd.f32 %v529, %v537
        %v545 = vadd.f32 %v530, %v537
        %v546 = vadd.f32 %v531, %v537
        %v547 = vld [vmem:[#allocation5] sm:$0xff]
        %v548 = vld [vmem:[#allocation5 + $0x8] sm:$0xff]
        %v549 = vadd.f32 %v451, %v547
        %v550 = vadd.f32 %v452, %v548
        %v551 = vadd.f32 %v453, %v547
        %v552 = vadd.f32 %v454, %v548
        %v553 = vadd.f32 %v455, %v547
        %v554 = vadd.f32 %v456, %v548
        %v555 = vadd.f32 %v457, %v547
        %v556 = vadd.f32 %v458, %v548
        %v557 = vadd.f32 %v459, %v547
        %v558 = vadd.f32 %v460, %v548
        %v559 = vadd.f32 %v461, %v547
        %v560 = vadd.f32 %v462, %v548
        %v561 = vadd.f32 %v463, %v547
        %v562 = vadd.f32 %v464, %v548
        %v563 = vadd.f32 %v465, %v547
        %v564 = vadd.f32 %v466, %v548
        %v565 = vld [vmem:[%s3] sm:$0xff]
        %v566 = vld [vmem:[%s3 + $0x8] sm:$0xff]
        %v567 = vld [vmem:[%s3 + $0x10] sm:$0xff]
        %v568 = vld [vmem:[%s3 + $0x18] sm:$0xff]
        %v569 = vld [vmem:[%s3 + $0x20] sm:$0xff]
        %v570 = vld [vmem:[%s3 + $0x28] sm:$0xff]
        %v571 = vld [vmem:[%s3 + $0x30] sm:$0xff]
        %v572 = vld [vmem:[%s3 + $0x38] sm:$0xff]
        %v573 = vld [vmem:[%s3 + $0x40] sm:$0xff]
        %v574 = vld [vmem:[%s3 + $0x48] sm:$0xff]
        %v575 = vld [vmem:[%s3 + $0x50] sm:$0xff]
        %v576 = vld [vmem:[%s3 + $0x58] sm:$0xff]
        %v577 = vld [vmem:[%s3 + $0x60] sm:$0xff]
        %v578 = vld [vmem:[%s3 + $0x68] sm:$0xff]
        %v579 = vld [vmem:[%s3 + $0x70] sm:$0xff]
        %v580 = vld [vmem:[%s3 + $0x78] sm:$0xff]
        %v581 = vld [vmem:[%s4] sm:$0x1]
        %v583 = vlaneseq
        %v584 = vshrl.u32 %v583, 7
        %v585 = vsub.s32 0, %v584
        %v586 = vrot.slane %v581, %v585
        %v596 = vrot.slane %v540, 7
        %vm597 = vcmask 1041409
        %v598 = vsel %vm597, %v596, %v539
        %v599 = vrot.slane %v541, 6
        %vm600 = vcmask 1042434
        %v601 = vsel %vm600, %v599, %v598
        %v602 = vrot.slane %v542, 5
        %vm603 = vcmask 1043459
        %v604 = vsel %vm603, %v602, %v601
        %v605 = vrot.slane %v543, 4
        %vm606 = vcmask 1044484
        %v607 = vsel %vm606, %v605, %v604
        %v608 = vrot.slane %v544, 3
        %vm609 = vcmask 1045509
        %v610 = vsel %vm609, %v608, %v607
        %v611 = vrot.slane %v545, 2
        %vm612 = vcmask 1046534
        %v613 = vsel %vm612, %v611, %v610
        %v614 = vrot.slane %v546, 1
        %vm615 = vcmask 1047559
        %v616 = vsel %vm615, %v614, %v613
        %618 = vmatprep.subr.mxu0 0.0
        %619 = vmatpush1.msra.mxu0 %v580
        %620 = vmatprep.subr.mxu0 0.0
        %621 = vmatpush1.msra.mxu0 %v579
        %622 = vmatprep.subr.mxu0 0.0
        %623 = vmatpush1.msra.mxu0 %v578
        %624 = vmatprep.subr.mxu0 0.0
        %625 = vmatpush1.msra.mxu0 %v577
        %626 = vmatprep.subr.mxu0 0.0
        %627 = vmatpush1.msra.mxu0 %v576
        %628 = vmatprep.subr.mxu0 0.0
        %629 = vmatpush1.msra.mxu0 %v575
        %630 = vmatprep.subr.mxu0 0.0
        %631 = vmatpush1.msra.mxu0 %v574
        %632 = vmatprep.subr.mxu0 0.0
        %633 = vmatpush1.msra.mxu0 %v573
        %634 = vmatprep.subr.mxu0 0.0
        %635 = vmatpush1.msra.mxu0 %v572
        %636 = vmatprep.subr.mxu0 0.0
        %637 = vmatpush1.msra.mxu0 %v571
        %638 = vmatprep.subr.mxu0 0.0
        %639 = vmatpush1.msra.mxu0 %v570
        %640 = vmatprep.subr.mxu0 0.0
        %641 = vmatpush1.msra.mxu0 %v569
        %642 = vmatprep.subr.mxu0 0.0
        %643 = vmatpush1.msra.mxu0 %v568
        %644 = vmatprep.subr.mxu0 0.0
        %645 = vmatpush1.msra.mxu0 %v567
        %646 = vmatprep.subr.mxu0 0.0
        %647 = vmatpush1.msra.mxu0 %v566
        %648 = vmatprep.subr.mxu0 0.0
        %649 = vmatpush1.msra.mxu0 %v565
        %650 = vmatprep.subr.mxu0 0.0
        %651 = vmatpush2.msra.mxu0 0.0
        %652 = vmatprep.subr.mxu0 0.0
        %653 = vmatpush2.msra.mxu0 0.0
        %654 = vmatprep.subr.mxu0 0.0
        %655 = vmatpush2.msra.mxu0 0.0
        %656 = vmatprep.subr.mxu0 0.0
        %657 = vmatpush2.msra.mxu0 0.0
        %658 = vmatprep.subr.mxu0 0.0
        %659 = vmatpush2.msra.mxu0 0.0
        %660 = vmatprep.subr.mxu0 0.0
        %661 = vmatpush2.msra.mxu0 0.0
        %662 = vmatprep.subr.mxu0 0.0
        %663 = vmatpush2.msra.mxu0 0.0
        %664 = vmatprep.subr.mxu0 0.0
        %665 = vmatpush2.msra.mxu0 0.0
        %666 = vmatprep.subr.mxu0 0.0
        %667 = vmatpush2.msra.mxu0 0.0
        %668 = vmatprep.subr.mxu0 0.0
        %669 = vmatpush2.msra.mxu0 0.0
        %670 = vmatprep.subr.mxu0 0.0
        %671 = vmatpush2.msra.mxu0 0.0
        %672 = vmatprep.subr.mxu0 0.0
        %673 = vmatpush2.msra.mxu0 0.0
        %674 = vmatprep.subr.mxu0 0.0
        %675 = vmatpush2.msra.mxu0 0.0
        %676 = vmatprep.subr.mxu0 0.0
        %677 = vmatpush2.msra.mxu0 0.0
        %678 = vmatprep.subr.mxu0 0.0
        %679 = vmatpush2.msra.mxu0 0.0
        %680 = vmatprep.subr.mxu0 0.0
        %681 = vmatpush2.msra.mxu0 0.0
        %682 = vmatprep.mubr.f32.mxu0 0.0
        %683 = vmatmul.mubr.f32.gmra.mxu0 %v616
        %v684 = vpop.f32.mrf.mxu0
        %v685 = vadd.f32 %v586, %v684
        %v686 = vpop.f32.mrf.mxu0
        %687 = vdwg.mxu0
        %v688 = vmul.f32 %v685, 0.25
        %v689 = vld [vmem:[#allocation7] sm:$0xff]
        %v690 = vld [vmem:[#allocation7 + $0x8] sm:$0xff]
        %v691 = vld [vmem:[#allocation7 + $0x10] sm:$0xff]
        %v692 = vld [vmem:[#allocation7 + $0x18] sm:$0xff]
        %v693 = vld [vmem:[#allocation7 + $0x20] sm:$0xff]
        %v694 = vld [vmem:[#allocation7 + $0x28] sm:$0xff]
        %v695 = vld [vmem:[#allocation7 + $0x30] sm:$0xff]
        %v696 = vld [vmem:[#allocation7 + $0x38] sm:$0xff]
        %v697 = vld [vmem:[#allocation7 + $0x40] sm:$0xff]
        %v698 = vld [vmem:[#allocation7 + $0x48] sm:$0xff]
        %v699 = vld [vmem:[#allocation7 + $0x50] sm:$0xff]
        %v700 = vld [vmem:[#allocation7 + $0x58] sm:$0xff]
        %v701 = vld [vmem:[#allocation7 + $0x60] sm:$0xff]
        %v702 = vld [vmem:[#allocation7 + $0x68] sm:$0xff]
        %v703 = vld [vmem:[#allocation7 + $0x70] sm:$0xff]
        %v704 = vld [vmem:[#allocation7 + $0x78] sm:$0xff]
        %v705 = vld [vmem:[#allocation7 + $0x80] sm:$0xff]
        %v706 = vld [vmem:[#allocation7 + $0x88] sm:$0xff]
        %v707 = vld [vmem:[#allocation7 + $0x90] sm:$0xff]
        %v708 = vld [vmem:[#allocation7 + $0x98] sm:$0xff]
        %v709 = vld [vmem:[#allocation7 + $0xa0] sm:$0xff]
        %v710 = vld [vmem:[#allocation7 + $0xa8] sm:$0xff]
        %v711 = vld [vmem:[#allocation7 + $0xb0] sm:$0xff]
        %v712 = vld [vmem:[#allocation7 + $0xb8] sm:$0xff]
        %v713 = vld [vmem:[#allocation7 + $0xc0] sm:$0xff]
        %v714 = vld [vmem:[#allocation7 + $0xc8] sm:$0xff]
        %v715 = vld [vmem:[#allocation7 + $0xd0] sm:$0xff]
        %v716 = vld [vmem:[#allocation7 + $0xd8] sm:$0xff]
        %v717 = vld [vmem:[#allocation7 + $0xe0] sm:$0xff]
        %v718 = vld [vmem:[#allocation7 + $0xe8] sm:$0xff]
        %v719 = vld [vmem:[#allocation7 + $0xf0] sm:$0xff]
        %v720 = vld [vmem:[#allocation7 + $0xf8] sm:$0xff]
        %v721 = vld [vmem:[%s6] sm:$0x3]
        %v723 = vlaneseq
        %v724 = vshrl.u32 %v723, 7
        %v725 = vsub.s32 0, %v724
        %v726 = vrot.slane %v721, %v725
        %v727 = vlaneseq
        %v728 = vshrl.u32 %v727, 7
        %v729 = vsub.s32 1, %v728
        %v730 = vrot.slane %v721, %v729
        %733 = vmatprep.subr.mxu0 %v720
        %734 = vmatpush1.msra.mxu0 %v719
        %735 = vmatprep.subr.mxu0 %v718
        %736 = vmatpush1.msra.mxu0 %v717
        %737 = vmatprep.subr.mxu0 %v716
        %738 = vmatpush1.msra.mxu0 %v715
        %739 = vmatprep.subr.mxu0 %v714
        %740 = vmatpush1.msra.mxu0 %v713
        %741 = vmatprep.subr.mxu0 %v712
        %742 = vmatpush1.msra.mxu0 %v711
        %743 = vmatprep.subr.mxu0 %v710
        %744 = vmatpush1.msra.mxu0 %v709
        %745 = vmatprep.subr.mxu0 %v708
        %746 = vmatpush1.msra.mxu0 %v707
        %747 = vmatprep.subr.mxu0 %v706
        %748 = vmatpush1.msra.mxu0 %v705
        %749 = vmatprep.subr.mxu0 %v704
        %750 = vmatpush1.msra.mxu0 %v703
        %751 = vmatprep.subr.mxu0 %v702
        %752 = vmatpush1.msra.mxu0 %v701
        %753 = vmatprep.subr.mxu0 %v700
        %754 = vmatpush1.msra.mxu0 %v699
        %755 = vmatprep.subr.mxu0 %v698
        %756 = vmatpush1.msra.mxu0 %v697
        %757 = vmatprep.subr.mxu0 %v696
        %758 = vmatpush1.msra.mxu0 %v695
        %759 = vmatprep.subr.mxu0 %v694
        %760 = vmatpush1.msra.mxu0 %v693
        %761 = vmatprep.subr.mxu0 %v692
        %762 = vmatpush1.msra.mxu0 %v691
        %763 = vmatprep.subr.mxu0 %v690
        %764 = vmatpush1.msra.mxu0 %v689
        %765 = vmatprep.subr.mxu0 0.0
        %766 = vmatpush2.msra.mxu0 0.0
        %767 = vmatprep.subr.mxu0 0.0
        %768 = vmatpush2.msra.mxu0 0.0
        %769 = vmatprep.subr.mxu0 0.0
        %770 = vmatpush2.msra.mxu0 0.0
        %771 = vmatprep.subr.mxu0 0.0
        %772 = vmatpush2.msra.mxu0 0.0
        %773 = vmatprep.subr.mxu0 0.0
        %774 = vmatpush2.msra.mxu0 0.0
        %775 = vmatprep.subr.mxu0 0.0
        %776 = vmatpush2.msra.mxu0 0.0
        %777 = vmatprep.subr.mxu0 0.0
        %778 = vmatpush2.msra.mxu0 0.0
        %779 = vmatprep.subr.mxu0 0.0
        %780 = vmatpush2.msra.mxu0 0.0
        %781 = vmatprep.subr.mxu0 0.0
        %782 = vmatpush2.msra.mxu0 0.0
        %783 = vmatprep.subr.mxu0 0.0
        %784 = vmatpush2.msra.mxu0 0.0
        %785 = vmatprep.subr.mxu0 0.0
        %786 = vmatpush2.msra.mxu0 0.0
        %787 = vmatprep.subr.mxu0 0.0
        %788 = vmatpush2.msra.mxu0 0.0
        %789 = vmatprep.subr.mxu0 0.0
        %790 = vmatpush2.msra.mxu0 0.0
        %791 = vmatprep.subr.mxu0 0.0
        %792 = vmatpush2.msra.mxu0 0.0
        %793 = vmatprep.subr.mxu0 0.0
        %794 = vmatpush2.msra.mxu0 0.0
        %795 = vmatprep.subr.mxu0 0.0
        %796 = vmatpush2.msra.mxu0 0.0
        %797 = vmatprep.mubr.f32.mxu0 0.0
        %798 = vmatmul.mubr.f32.gmra.mxu0 %v616
        %v799 = vpop.f32.mrf.mxu0
        %v800 = vadd.f32 %v726, %v799
        %v801 = vpop.f32.mrf.mxu0
        %v802 = vadd.f32 %v730, %v801
        %803 = vdwg.mxu0
        %804 = vmatprep.subr.mxu0 %v720
        %805 = vmatpush1.msra.mxu0 %v719
        %806 = vmatprep.subr.mxu0 %v718
        %807 = vmatpush1.msra.mxu0 %v717
        %808 = vmatprep.subr.mxu0 %v716
        %809 = vmatpush1.msra.mxu0 %v715
        %810 = vmatprep.subr.mxu0 %v714
        %811 = vmatpush1.msra.mxu0 %v713
        %812 = vmatprep.subr.mxu0 %v712
        %813 = vmatpush1.msra.mxu0 %v711
        %814 = vmatprep.subr.mxu0 %v710
        %815 = vmatpush1.msra.mxu0 %v709
        %816 = vmatprep.subr.mxu0 %v708
        %817 = vmatpush1.msra.mxu0 %v707
        %818 = vmatprep.subr.mxu0 %v706
        %819 = vmatpush1.msra.mxu0 %v705
        %820 = vmatprep.subr.mxu0 %v704
        %821 = vmatpush1.msra.mxu0 %v703
        %822 = vmatprep.subr.mxu0 %v702
        %823 = vmatpush1.msra.mxu0 %v701
        %824 = vmatprep.subr.mxu0 %v700
        %825 = vmatpush1.msra.mxu0 %v699
        %826 = vmatprep.subr.mxu0 %v698
        %827 = vmatpush1.msra.mxu0 %v697
        %828 = vmatprep.subr.mxu0 %v696
        %829 = vmatpush1.msra.mxu0 %v695
        %830 = vmatprep.subr.mxu0 %v694
        %831 = vmatpush1.msra.mxu0 %v693
        %832 = vmatprep.subr.mxu0 %v692
        %833 = vmatpush1.msra.mxu0 %v691
        %834 = vmatprep.subr.mxu0 %v690
        %835 = vmatpush1.msra.mxu0 %v689
        %836 = vmatprep.subr.mxu0 0.0
        %837 = vmatpush2.msra.mxu0 0.0
        %838 = vmatprep.subr.mxu0 0.0
        %839 = vmatpush2.msra.mxu0 0.0
        %840 = vmatprep.subr.mxu0 0.0
        %841 = vmatpush2.msra.mxu0 0.0
        %842 = vmatprep.subr.mxu0 0.0
        %843 = vmatpush2.msra.mxu0 0.0
        %844 = vmatprep.subr.mxu0 0.0
        %845 = vmatpush2.msra.mxu0 0.0
        %846 = vmatprep.subr.mxu0 0.0
        %847 = vmatpush2.msra.mxu0 0.0
        %848 = vmatprep.subr.mxu0 0.0
        %849 = vmatpush2.msra.mxu0 0.0
        %850 = vmatprep.subr.mxu0 0.0
        %851 = vmatpush2.msra.mxu0 0.0
        %852 = vmatprep.subr.mxu0 0.0
        %853 = vmatpush2.msra.mxu0 0.0
        %854 = vmatprep.subr.mxu0 0.0
        %855 = vmatpush2.msra.mxu0 0.0
        %856 = vmatprep.subr.mxu0 0.0
        %857 = vmatpush2.msra.mxu0 0.0
        %858 = vmatprep.subr.mxu0 0.0
        %859 = vmatpush2.msra.mxu0 0.0
        %860 = vmatprep.subr.mxu0 0.0
        %861 = vmatpush2.msra.mxu0 0.0
        %862 = vmatprep.subr.mxu0 0.0
        %863 = vmatpush2.msra.mxu0 0.0
        %864 = vmatprep.subr.mxu0 0.0
        %865 = vmatpush2.msra.mxu0 0.0
        %866 = vmatprep.subr.mxu0 0.0
        %867 = vmatpush2.msra.mxu0 0.0
        %868 = vmatprep.mubr.f32.mxu0 0.0
        %869 = vmatmul.mubr.f32.gmra.mxu0 %v549
        %v870 = vpop.f32.mrf.mxu0
        %v871 = vadd.f32 %v726, %v870
        %v872 = vpop.f32.mrf.mxu0
        %v873 = vadd.f32 %v730, %v872
        %874 = vmatprep.mubr.f32.mxu0 0.0
        %875 = vmatmul.mubr.f32.gmra.mxu0 %v550
        %v876 = vpop.f32.mrf.mxu0
        %v877 = vadd.f32 %v726, %v876
        %v878 = vpop.f32.mrf.mxu0
        %v879 = vadd.f32 %v730, %v878
        %880 = vmatprep.mubr.f32.mxu0 0.0
        %881 = vmatmul.mubr.f32.gmra.mxu0 %v551
        %v882 = vpop.f32.mrf.mxu0
        %v883 = vadd.f32 %v726, %v882
        %v884 = vpop.f32.mrf.mxu0
        %v885 = vadd.f32 %v730, %v884
        %886 = vmatprep.mubr.f32.mxu0 0.0
        %887 = vmatmul.mubr.f32.gmra.mxu0 %v552
        %v888 = vpop.f32.mrf.mxu0
        %v889 = vadd.f32 %v726, %v888
        %v890 = vpop.f32.mrf.mxu0
        %v891 = vadd.f32 %v730, %v890
        %892 = vmatprep.mubr.f32.mxu0 0.0
        %893 = vmatmul.mubr.f32.gmra.mxu0 %v553
        %v894 = vpop.f32.mrf.mxu0
        %v895 = vadd.f32 %v726, %v894
        %v896 = vpop.f32.mrf.mxu0
        %v897 = vadd.f32 %v730, %v896
        %898 = vmatprep.mubr.f32.mxu0 0.0
        %899 = vmatmul.mubr.f32.gmra.mxu0 %v554
        %v900 = vpop.f32.mrf.mxu0
        %v901 = vadd.f32 %v726, %v900
        %v902 = vpop.f32.mrf.mxu0
        %v903 = vadd.f32 %v730, %v902
        %904 = vmatprep.mubr.f32.mxu0 0.0
        %905 = vmatmul.mubr.f32.gmra.mxu0 %v555
        %v906 = vpop.f32.mrf.mxu0
        %v907 = vadd.f32 %v726, %v906
        %v908 = vpop.f32.mrf.mxu0
        %v909 = vadd.f32 %v730, %v908
        %910 = vmatprep.mubr.f32.mxu0 0.0
        %911 = vmatmul.mubr.f32.gmra.mxu0 %v556
        %v912 = vpop.f32.mrf.mxu0
        %v913 = vadd.f32 %v726, %v912
        %v914 = vpop.f32.mrf.mxu0
        %v915 = vadd.f32 %v730, %v914
        %916 = vmatprep.mubr.f32.mxu0 0.0
        %917 = vmatmul.mubr.f32.gmra.mxu0 %v557
        %v918 = vpop.f32.mrf.mxu0
        %v919 = vadd.f32 %v726, %v918
        %v920 = vpop.f32.mrf.mxu0
        %v921 = vadd.f32 %v730, %v920
        %922 = vmatprep.mubr.f32.mxu0 0.0
        %923 = vmatmul.mubr.f32.gmra.mxu0 %v558
        %v924 = vpop.f32.mrf.mxu0
        %v925 = vadd.f32 %v726, %v924
        %v926 = vpop.f32.mrf.mxu0
        %v927 = vadd.f32 %v730, %v926
        %928 = vmatprep.mubr.f32.mxu0 0.0
        %929 = vmatmul.mubr.f32.gmra.mxu0 %v559
        %v930 = vpop.f32.mrf.mxu0
        %v931 = vadd.f32 %v726, %v930
        %v932 = vpop.f32.mrf.mxu0
        %v933 = vadd.f32 %v730, %v932
        %934 = vmatprep.mubr.f32.mxu0 0.0
        %935 = vmatmul.mubr.f32.gmra.mxu0 %v560
        %v936 = vpop.f32.mrf.mxu0
        %v937 = vadd.f32 %v726, %v936
        %v938 = vpop.f32.mrf.mxu0
        %v939 = vadd.f32 %v730, %v938
        %940 = vmatprep.mubr.f32.mxu0 0.0
        %941 = vmatmul.mubr.f32.gmra.mxu0 %v561
        %v942 = vpop.f32.mrf.mxu0
        %v943 = vadd.f32 %v726, %v942
        %v944 = vpop.f32.mrf.mxu0
        %v945 = vadd.f32 %v730, %v944
        %946 = vmatprep.mubr.f32.mxu0 0.0
        %947 = vmatmul.mubr.f32.gmra.mxu0 %v562
        %v948 = vpop.f32.mrf.mxu0
        %v949 = vadd.f32 %v726, %v948
        %v950 = vpop.f32.mrf.mxu0
        %v951 = vadd.f32 %v730, %v950
        %952 = vmatprep.mubr.f32.mxu0 0.0
        %953 = vmatmul.mubr.f32.gmra.mxu0 %v563
        %v954 = vpop.f32.mrf.mxu0
        %v955 = vadd.f32 %v726, %v954
        %v956 = vpop.f32.mrf.mxu0
        %v957 = vadd.f32 %v730, %v956
        %958 = vmatprep.mubr.f32.mxu0 0.0
        %959 = vmatmul.mubr.f32.gmra.mxu0 %v564
        %v960 = vpop.f32.mrf.mxu0
        %v961 = vadd.f32 %v726, %v960
        %v962 = vpop.f32.mrf.mxu0
        %v963 = vadd.f32 %v730, %v962
        %964 = vdwg.mxu0
        %v965 = vld [vmem:[%s9] sm:$0xff]
        %v966 = vld [vmem:[%s9 + $0x8] sm:$0xff]
        %v967 = vld [vmem:[%s9 + $0x10] sm:$0xff]
        %v968 = vld [vmem:[%s9 + $0x18] sm:$0xff]
        %v969 = vld [vmem:[%s9 + $0x20] sm:$0xff]
        %v970 = vld [vmem:[%s9 + $0x28] sm:$0xff]
        %v971 = vld [vmem:[%s9 + $0x30] sm:$0xff]
        %v972 = vld [vmem:[%s9 + $0x38] sm:$0xff]
        %v973 = vld [vmem:[%s9 + $0x40] sm:$0xff]
        %v974 = vld [vmem:[%s9 + $0x48] sm:$0xff]
        %v975 = vld [vmem:[%s9 + $0x50] sm:$0xff]
        %v976 = vld [vmem:[%s9 + $0x58] sm:$0xff]
        %v977 = vld [vmem:[%s9 + $0x60] sm:$0xff]
        %v978 = vld [vmem:[%s9 + $0x68] sm:$0xff]
        %v979 = vld [vmem:[%s9 + $0x70] sm:$0xff]
        %v980 = vld [vmem:[%s9 + $0x78] sm:$0xff]
        %v981 = vld [vmem:[%s10] sm:$0xff]
        %v983 = vcombine.high %v688, %v688
        %v985 = vunpack.c.l.s4 1966171168
        %v986 = vunpack.c.0.s8 %v985
        %v987 = vlaneseq
        %v988 = vshrl.u32 %v987, 7
        %v989 = vsub.s32 %v986, %v988
        %v990 = vrot.slane %v688, %v989
        %v992 = vunpack.c.l.s4 1966171168
        %v993 = vunpack.c.0.s8 %v992
        %v994 = vlaneseq
        %v995 = vshrl.u32 %v994, 7
        %v996 = vsub.s32 %v993, %v995
        %v997 = vrot.slane %v983, %v996
        %v998 = vcombine.high %v990, %v990
        %v999 = vcombine.high %v997, %v997
        %v1001 = vunpack.c.l.s4 1966171168
        %v1002 = vunpack.c.0.s8 %v1001
        %v1003 = vlaneseq
        %v1004 = vshrl.u32 %v1003, 7
        %v1005 = vsub.s32 %v1002, %v1004
        %v1006 = vrot.slane %v990, %v1005
        %v1008 = vunpack.c.l.s4 1966171168
        %v1009 = vunpack.c.0.s8 %v1008
        %v1010 = vlaneseq
        %v1011 = vshrl.u32 %v1010, 7
        %v1012 = vsub.s32 %v1009, %v1011
        %v1013 = vrot.slane %v997, %v1012
        %v1015 = vunpack.c.l.s4 1966171168
        %v1016 = vunpack.c.0.s8 %v1015
        %v1017 = vlaneseq
        %v1018 = vshrl.u32 %v1017, 7
        %v1019 = vsub.s32 %v1016, %v1018
        %v1020 = vrot.slane %v998, %v1019
        %v1022 = vunpack.c.l.s4 1966171168
        %v1023 = vunpack.c.0.s8 %v1022
        %v1024 = vlaneseq
        %v1025 = vshrl.u32 %v1024, 7
        %v1026 = vsub.s32 %v1023, %v1025
        %v1027 = vrot.slane %v999, %v1026
        %v1028 = vcombine.high %v1006, %v1006
        %v1029 = vcombine.high %v1013, %v1013
        %v1030 = vcombine.high %v1020, %v1020
        %v1031 = vcombine.high %v1027, %v1027
        %v1032 = vlaneseq
        %v1033 = vshrl.u32 %v1032, 7
        %v1034 = vsub.s32 0, %v1033
        %v1035 = vrot.slane %v1006, %v1034
        %v1036 = vlaneseq
        %v1037 = vshrl.u32 %v1036, 7
        %v1038 = vsub.s32 0, %v1037
        %v1039 = vrot.slane %v1020, %v1038
        %v1040 = vlaneseq
        %v1041 = vshrl.u32 %v1040, 7
        %v1042 = vsub.s32 0, %v1041
        %v1043 = vrot.slane %v1028, %v1042
        %v1044 = vlaneseq
        %v1045 = vshrl.u32 %v1044, 7
        %v1046 = vsub.s32 0, %v1045
        %v1047 = vrot.slane %v1030, %v1046
        %v1048 = vlaneseq
        %v1049 = vshrl.u32 %v1048, 7
        %v1050 = vsub.s32 0, %v1049
        %v1051 = vrot.slane %v1013, %v1050
        %v1052 = vlaneseq
        %v1053 = vshrl.u32 %v1052, 7
        %v1054 = vsub.s32 0, %v1053
        %v1055 = vrot.slane %v1027, %v1054
        %v1056 = vlaneseq
        %v1057 = vshrl.u32 %v1056, 7
        %v1058 = vsub.s32 0, %v1057
        %v1059 = vrot.slane %v1029, %v1058
        %v1060 = vlaneseq
        %v1061 = vshrl.u32 %v1060, 7
        %v1062 = vsub.s32 0, %v1061
        %v1063 = vrot.slane %v1031, %v1062
        %v1072 = vmul.f32 %v871, %v1035
        %v1073 = vmul.f32 %v877, %v1035
        %v1074 = vmul.f32 %v883, %v1039
        %v1075 = vmul.f32 %v889, %v1039
        %v1076 = vmul.f32 %v895, %v1043
        %v1077 = vmul.f32 %v901, %v1043
        %v1078 = vmul.f32 %v907, %v1047
        %v1079 = vmul.f32 %v913, %v1047
        %v1080 = vmul.f32 %v919, %v1051
        %v1081 = vmul.f32 %v925, %v1051
        %v1082 = vmul.f32 %v931, %v1055
        %v1083 = vmul.f32 %v937, %v1055
        %v1084 = vmul.f32 %v943, %v1059
        %v1085 = vmul.f32 %v949, %v1059
        %v1086 = vmul.f32 %v955, %v1063
        %v1087 = vmul.f32 %v961, %v1063
        %1088 = vmatprep.subr.mxu0 0.0
        %1089 = vmatpush1.msra.mxu0 %v980
        %1090 = vmatprep.subr.mxu0 0.0
        %1091 = vmatpush1.msra.mxu0 %v979
        %1092 = vmatprep.subr.mxu0 0.0
        %1093 = vmatpush1.msra.mxu0 %v978
        %1094 = vmatprep.subr.mxu0 0.0
        %1095 = vmatpush1.msra.mxu0 %v977
        %1096 = vmatprep.subr.mxu0 0.0
        %1097 = vmatpush1.msra.mxu0 %v976
        %1098 = vmatprep.subr.mxu0 0.0
        %1099 = vmatpush1.msra.mxu0 %v975
        %1100 = vmatprep.subr.mxu0 0.0
        %1101 = vmatpush1.msra.mxu0 %v974
        %1102 = vmatprep.subr.mxu0 0.0
        %1103 = vmatpush1.msra.mxu0 %v973
        %1104 = vmatprep.subr.mxu0 0.0
        %1105 = vmatpush1.msra.mxu0 %v972
        %1106 = vmatprep.subr.mxu0 0.0
        %1107 = vmatpush1.msra.mxu0 %v971
        %1108 = vmatprep.subr.mxu0 0.0
        %1109 = vmatpush1.msra.mxu0 %v970
        %1110 = vmatprep.subr.mxu0 0.0
        %1111 = vmatpush1.msra.mxu0 %v969
        %1112 = vmatprep.subr.mxu0 0.0
        %1113 = vmatpush1.msra.mxu0 %v968
        %1114 = vmatprep.subr.mxu0 0.0
        %1115 = vmatpush1.msra.mxu0 %v967
        %1116 = vmatprep.subr.mxu0 0.0
        %1117 = vmatpush1.msra.mxu0 %v966
        %1118 = vmatprep.subr.mxu0 0.0
        %1119 = vmatpush1.msra.mxu0 %v965
        %1120 = vmatprep.subr.mxu0 0.0
        %1121 = vmatpush2.msra.mxu0 0.0
        %1122 = vmatprep.subr.mxu0 0.0
        %1123 = vmatpush2.msra.mxu0 0.0
        %1124 = vmatprep.subr.mxu0 0.0
        %1125 = vmatpush2.msra.mxu0 0.0
        %1126 = vmatprep.subr.mxu0 0.0
        %1127 = vmatpush2.msra.mxu0 0.0
        %1128 = vmatprep.subr.mxu0 0.0
        %1129 = vmatpush2.msra.mxu0 0.0
        %1130 = vmatprep.subr.mxu0 0.0
        %1131 = vmatpush2.msra.mxu0 0.0
        %1132 = vmatprep.subr.mxu0 0.0
        %1133 = vmatpush2.msra.mxu0 0.0
        %1134 = vmatprep.subr.mxu0 0.0
        %1135 = vmatpush2.msra.mxu0 0.0
        %1136 = vmatprep.subr.mxu0 0.0
        %1137 = vmatpush2.msra.mxu0 0.0
        %1138 = vmatprep.subr.mxu0 0.0
        %1139 = vmatpush2.msra.mxu0 0.0
        %1140 = vmatprep.subr.mxu0 0.0
        %1141 = vmatpush2.msra.mxu0 0.0
        %1142 = vmatprep.subr.mxu0 0.0
        %1143 = vmatpush2.msra.mxu0 0.0
        %1144 = vmatprep.subr.mxu0 0.0
        %1145 = vmatpush2.msra.mxu0 0.0
        %1146 = vmatprep.subr.mxu0 0.0
        %1147 = vmatpush2.msra.mxu0 0.0
        %1148 = vmatprep.subr.mxu0 0.0
        %1149 = vmatpush2.msra.mxu0 0.0
        %1150 = vmatprep.subr.mxu0 0.0
        %1151 = vmatpush2.msra.mxu0 0.0
        %1152 = vmatprep.mubr.f32.mxu0 0.0
        %1153 = vmatmul.mubr.f32.gmra.mxu0 %v1072
        %v1154 = vpop.f32.mrf.mxu0
        %v1155 = vadd.f32 0.0, %v1154
        %v1156 = vpop.f32.mrf.mxu0
        %1157 = vmatprep.mubr.f32.mxu0 0.0
        %1158 = vmatmul.mubr.f32.gmra.mxu0 %v1073
        %v1159 = vpop.f32.mrf.mxu0
        %v1160 = vadd.f32 0.0, %v1159
        %v1161 = vpop.f32.mrf.mxu0
        %1162 = vmatprep.mubr.f32.mxu0 0.0
        %1163 = vmatmul.mubr.f32.gmra.mxu0 %v1074
        %v1164 = vpop.f32.mrf.mxu0
        %v1165 = vadd.f32 0.0, %v1164
        %v1166 = vpop.f32.mrf.mxu0
        %1167 = vmatprep.mubr.f32.mxu0 0.0
        %1168 = vmatmul.mubr.f32.gmra.mxu0 %v1075
        %v1169 = vpop.f32.mrf.mxu0
        %v1170 = vadd.f32 0.0, %v1169
        %v1171 = vpop.f32.mrf.mxu0
        %1172 = vmatprep.mubr.f32.mxu0 0.0
        %1173 = vmatmul.mubr.f32.gmra.mxu0 %v1076
        %v1174 = vpop.f32.mrf.mxu0
        %v1175 = vadd.f32 0.0, %v1174
        %v1176 = vpop.f32.mrf.mxu0
        %1177 = vmatprep.mubr.f32.mxu0 0.0
        %1178 = vmatmul.mubr.f32.gmra.mxu0 %v1077
        %v1179 = vpop.f32.mrf.mxu0
        %v1180 = vadd.f32 0.0, %v1179
        %v1181 = vpop.f32.mrf.mxu0
        %1182 = vmatprep.mubr.f32.mxu0 0.0
        %1183 = vmatmul.mubr.f32.gmra.mxu0 %v1078
        %v1184 = vpop.f32.mrf.mxu0
        %v1185 = vadd.f32 0.0, %v1184
        %v1186 = vpop.f32.mrf.mxu0
        %1187 = vmatprep.mubr.f32.mxu0 0.0
        %1188 = vmatmul.mubr.f32.gmra.mxu0 %v1079
        %v1189 = vpop.f32.mrf.mxu0
        %v1190 = vadd.f32 0.0, %v1189
        %v1191 = vpop.f32.mrf.mxu0
        %1192 = vmatprep.mubr.f32.mxu0 0.0
        %1193 = vmatmul.mubr.f32.gmra.mxu0 %v1080
        %v1194 = vpop.f32.mrf.mxu0
        %v1195 = vadd.f32 0.0, %v1194
        %v1196 = vpop.f32.mrf.mxu0
        %1197 = vmatprep.mubr.f32.mxu0 0.0
        %1198 = vmatmul.mubr.f32.gmra.mxu0 %v1081
        %v1199 = vpop.f32.mrf.mxu0
        %v1200 = vadd.f32 0.0, %v1199
        %v1201 = vpop.f32.mrf.mxu0
        %1202 = vmatprep.mubr.f32.mxu0 0.0
        %1203 = vmatmul.mubr.f32.gmra.mxu0 %v1082
        %v1204 = vpop.f32.mrf.mxu0
        %v1205 = vadd.f32 0.0, %v1204
        %v1206 = vpop.f32.mrf.mxu0
        %1207 = vmatprep.mubr.f32.mxu0 0.0
        %1208 = vmatmul.mubr.f32.gmra.mxu0 %v1083
        %v1209 = vpop.f32.mrf.mxu0
        %v1210 = vadd.f32 0.0, %v1209
        %v1211 = vpop.f32.mrf.mxu0
        %1212 = vmatprep.mubr.f32.mxu0 0.0
        %1213 = vmatmul.mubr.f32.gmra.mxu0 %v1084
        %v1214 = vpop.f32.mrf.mxu0
        %v1215 = vadd.f32 0.0, %v1214
        %v1216 = vpop.f32.mrf.mxu0
        %1217 = vmatprep.mubr.f32.mxu0 0.0
        %1218 = vmatmul.mubr.f32.gmra.mxu0 %v1085
        %v1219 = vpop.f32.mrf.mxu0
        %v1220 = vadd.f32 0.0, %v1219
        %v1221 = vpop.f32.mrf.mxu0
        %1222 = vmatprep.mubr.f32.mxu0 0.0
        %1223 = vmatmul.mubr.f32.gmra.mxu0 %v1086
        %v1224 = vpop.f32.mrf.mxu0
        %v1225 = vadd.f32 0.0, %v1224
        %v1226 = vpop.f32.mrf.mxu0
        %1227 = vmatprep.mubr.f32.mxu0 0.0
        %1228 = vmatmul.mubr.f32.gmra.mxu0 %v1087
        %v1229 = vpop.f32.mrf.mxu0
        %v1230 = vadd.f32 0.0, %v1229
        %v1231 = vpop.f32.mrf.mxu0
        %1232 = vdwg.mxu0
        %v1233 = vmul.f32 %v800, %v688
        %1234 = vmatprep.subr.mxu0 0.0
        %1235 = vmatpush1.msra.mxu0 %v980
        %1236 = vmatprep.subr.mxu0 0.0
        %1237 = vmatpush1.msra.mxu0 %v979
        %1238 = vmatprep.subr.mxu0 0.0
        %1239 = vmatpush1.msra.mxu0 %v978
        %1240 = vmatprep.subr.mxu0 0.0
        %1241 = vmatpush1.msra.mxu0 %v977
        %1242 = vmatprep.subr.mxu0 0.0
        %1243 = vmatpush1.msra.mxu0 %v976
        %1244 = vmatprep.subr.mxu0 0.0
        %1245 = vmatpush1.msra.mxu0 %v975
        %1246 = vmatprep.subr.mxu0 0.0
        %1247 = vmatpush1.msra.mxu0 %v974
        %1248 = vmatprep.subr.mxu0 0.0
        %1249 = vmatpush1.msra.mxu0 %v973
        %1250 = vmatprep.subr.mxu0 0.0
        %1251 = vmatpush1.msra.mxu0 %v972
        %1252 = vmatprep.subr.mxu0 0.0
        %1253 = vmatpush1.msra.mxu0 %v971
        %1254 = vmatprep.subr.mxu0 0.0
        %1255 = vmatpush1.msra.mxu0 %v970
        %1256 = vmatprep.subr.mxu0 0.0
        %1257 = vmatpush1.msra.mxu0 %v969
        %1258 = vmatprep.subr.mxu0 0.0
        %1259 = vmatpush1.msra.mxu0 %v968
        %1260 = vmatprep.subr.mxu0 0.0
        %1261 = vmatpush1.msra.mxu0 %v967
        %1262 = vmatprep.subr.mxu0 0.0
        %1263 = vmatpush1.msra.mxu0 %v966
        %1264 = vmatprep.subr.mxu0 0.0
        %1265 = vmatpush1.msra.mxu0 %v965
        %1266 = vmatprep.subr.mxu0 0.0
        %1267 = vmatpush2.msra.mxu0 0.0
        %1268 = vmatprep.subr.mxu0 0.0
        %1269 = vmatpush2.msra.mxu0 0.0
        %1270 = vmatprep.subr.mxu0 0.0
        %1271 = vmatpush2.msra.mxu0 0.0
        %1272 = vmatprep.subr.mxu0 0.0
        %1273 = vmatpush2.msra.mxu0 0.0
        %1274 = vmatprep.subr.mxu0 0.0
        %1275 = vmatpush2.msra.mxu0 0.0
        %1276 = vmatprep.subr.mxu0 0.0
        %1277 = vmatpush2.msra.mxu0 0.0
        %1278 = vmatprep.subr.mxu0 0.0
        %1279 = vmatpush2.msra.mxu0 0.0
        %1280 = vmatprep.subr.mxu0 0.0
        %1281 = vmatpush2.msra.mxu0 0.0
        %1282 = vmatprep.subr.mxu0 0.0
        %1283 = vmatpush2.msra.mxu0 0.0
        %1284 = vmatprep.subr.mxu0 0.0
        %1285 = vmatpush2.msra.mxu0 0.0
        %1286 = vmatprep.subr.mxu0 0.0
        %1287 = vmatpush2.msra.mxu0 0.0
        %1288 = vmatprep.subr.mxu0 0.0
        %1289 = vmatpush2.msra.mxu0 0.0
        %1290 = vmatprep.subr.mxu0 0.0
        %1291 = vmatpush2.msra.mxu0 0.0
        %1292 = vmatprep.subr.mxu0 0.0
        %1293 = vmatpush2.msra.mxu0 0.0
        %1294 = vmatprep.subr.mxu0 0.0
        %1295 = vmatpush2.msra.mxu0 0.0
        %1296 = vmatprep.subr.mxu0 0.0
        %1297 = vmatpush2.msra.mxu0 0.0
        %1298 = vmatprep.mubr.f32.mxu0 0.0
        %1299 = vmatmul.mubr.f32.gmra.mxu0 %v1233
        %v1300 = vpop.f32.mrf.mxu0
        %v1301 = vadd.f32 0.0, %v1300
        %v1302 = vpop.f32.mrf.mxu0
        %1303 = vdwg.mxu0
        %vm1304 = vcmask 64512
        %v1305 = vsel %vm1304, %v1155, -inf
        %v1306 = vsel %vm1304, %v1160, -inf
        %v1307 = vmax.f32 %v1305, %v1306
        %v1308 = vrot.slane %v1307, 4
        %v1309 = vmax.f32 %v1307, %v1308
        %v1310 = vrot.slane %v1309, 2
        %v1311 = vmax.f32 %v1309, %v1310
        %v1312 = vrot.slane %v1311, 1
        %v1313 = vmax.f32 %v1311, %v1312
        %v1314 = vsel %vm1304, %v1165, -inf
        %v1315 = vsel %vm1304, %v1170, -inf
        %v1316 = vmax.f32 %v1314, %v1315
        %v1317 = vrot.slane %v1316, 4
        %v1318 = vmax.f32 %v1316, %v1317
        %v1319 = vrot.slane %v1318, 2
        %v1320 = vmax.f32 %v1318, %v1319
        %v1321 = vrot.slane %v1320, 1
        %v1322 = vmax.f32 %v1320, %v1321
        %v1323 = vsel %vm1304, %v1175, -inf
        %v1324 = vsel %vm1304, %v1180, -inf
        %v1325 = vmax.f32 %v1323, %v1324
        %v1326 = vrot.slane %v1325, 4
        %v1327 = vmax.f32 %v1325, %v1326
        %v1328 = vrot.slane %v1327, 2
        %v1329 = vmax.f32 %v1327, %v1328
        %v1330 = vrot.slane %v1329, 1
        %v1331 = vmax.f32 %v1329, %v1330
        %v1332 = vsel %vm1304, %v1185, -inf
        %v1333 = vsel %vm1304, %v1190, -inf
        %v1334 = vmax.f32 %v1332, %v1333
        %v1335 = vrot.slane %v1334, 4
        %v1336 = vmax.f32 %v1334, %v1335
        %v1337 = vrot.slane %v1336, 2
        %v1338 = vmax.f32 %v1336, %v1337
        %v1339 = vrot.slane %v1338, 1
        %v1340 = vmax.f32 %v1338, %v1339
        %v1341 = vsel %vm1304, %v1195, -inf
        %v1342 = vsel %vm1304, %v1200, -inf
        %v1343 = vmax.f32 %v1341, %v1342
        %v1344 = vrot.slane %v1343, 4
        %v1345 = vmax.f32 %v1343, %v1344
        %v1346 = vrot.slane %v1345, 2
        %v1347 = vmax.f32 %v1345, %v1346
        %v1348 = vrot.slane %v1347, 1
        %v1349 = vmax.f32 %v1347, %v1348
        %v1350 = vsel %vm1304, %v1205, -inf
        %v1351 = vsel %vm1304, %v1210, -inf
        %v1352 = vmax.f32 %v1350, %v1351
        %v1353 = vrot.slane %v1352, 4
        %v1354 = vmax.f32 %v1352, %v1353
        %v1355 = vrot.slane %v1354, 2
        %v1356 = vmax.f32 %v1354, %v1355
        %v1357 = vrot.slane %v1356, 1
        %v1358 = vmax.f32 %v1356, %v1357
        %v1359 = vsel %vm1304, %v1215, -inf
        %v1360 = vsel %vm1304, %v1220, -inf
        %v1361 = vmax.f32 %v1359, %v1360
        %v1362 = vrot.slane %v1361, 4
        %v1363 = vmax.f32 %v1361, %v1362
        %v1364 = vrot.slane %v1363, 2
        %v1365 = vmax.f32 %v1363, %v1364
        %v1366 = vrot.slane %v1365, 1
        %v1367 = vmax.f32 %v1365, %v1366
        %v1368 = vsel %vm1304, %v1225, -inf
        %v1369 = vsel %vm1304, %v1230, -inf
        %v1370 = vmax.f32 %v1368, %v1369
        %v1371 = vrot.slane %v1370, 4
        %v1372 = vmax.f32 %v1370, %v1371
        %v1373 = vrot.slane %v1372, 2
        %v1374 = vmax.f32 %v1372, %v1373
        %v1375 = vrot.slane %v1374, 1
        %v1376 = vmax.f32 %v1374, %v1375
        %v1378 = vrot.slane %v1301, 1
        %v1379 = vrot.slane %v1301, 2
        %v1380 = vrot.slane %v1301, 3
        %v1381 = vrot.slane %v1301, 4
        %v1382 = vrot.slane %v1301, 5
        %v1383 = vrot.slane %v1301, 6
        %v1384 = vrot.slane %v1301, 7
        %v1393 = vmax.f32 %v1313, %v1301
        %v1394 = vmax.f32 %v1322, %v1378
        %v1395 = vmax.f32 %v1331, %v1379
        %v1396 = vmax.f32 %v1340, %v1380
        %v1397 = vmax.f32 %v1349, %v1381
        %v1398 = vmax.f32 %v1358, %v1382
        %v1399 = vmax.f32 %v1367, %v1383
        %v1400 = vmax.f32 %v1376, %v1384
        %v1401 = vlaneseq
        %v1402 = vshrl.u32 %v1401, 7
        %v1403 = vsub.s32 0, %v1402
        %v1404 = vrot.slane %v1393, %v1403
        %v1405 = vlaneseq
        %v1406 = vshrl.u32 %v1405, 7
        %v1407 = vsub.s32 0, %v1406
        %v1408 = vrot.slane %v1394, %v1407
        %v1409 = vlaneseq
        %v1410 = vshrl.u32 %v1409, 7
        %v1411 = vsub.s32 0, %v1410
        %v1412 = vrot.slane %v1395, %v1411
        %v1413 = vlaneseq
        %v1414 = vshrl.u32 %v1413, 7
        %v1415 = vsub.s32 0, %v1414
        %v1416 = vrot.slane %v1396, %v1415
        %v1417 = vlaneseq
        %v1418 = vshrl.u32 %v1417, 7
        %v1419 = vsub.s32 0, %v1418
        %v1420 = vrot.slane %v1397, %v1419
        %v1421 = vlaneseq
        %v1422 = vshrl.u32 %v1421, 7
        %v1423 = vsub.s32 0, %v1422
        %v1424 = vrot.slane %v1398, %v1423
        %v1425 = vlaneseq
        %v1426 = vshrl.u32 %v1425, 7
        %v1427 = vsub.s32 0, %v1426
        %v1428 = vrot.slane %v1399, %v1427
        %v1429 = vlaneseq
        %v1430 = vshrl.u32 %v1429, 7
        %v1431 = vsub.s32 0, %v1430
        %v1432 = vrot.slane %v1400, %v1431
        %v1433 = vsub.f32 %v1155, %v1404
        %v1434 = vsub.f32 %v1160, %v1404
        %v1435 = vsub.f32 %v1165, %v1408
        %v1436 = vsub.f32 %v1170, %v1408
        %v1437 = vsub.f32 %v1175, %v1412
        %v1438 = vsub.f32 %v1180, %v1412
        %v1439 = vsub.f32 %v1185, %v1416
        %v1440 = vsub.f32 %v1190, %v1416
        %v1441 = vsub.f32 %v1195, %v1420
        %v1442 = vsub.f32 %v1200, %v1420
        %v1443 = vsub.f32 %v1205, %v1424
        %v1444 = vsub.f32 %v1210, %v1424
        %v1445 = vsub.f32 %v1215, %v1428
        %v1446 = vsub.f32 %v1220, %v1428
        %v1447 = vsub.f32 %v1225, %v1432
        %v1448 = vsub.f32 %v1230, %v1432
        %v1449 = vmul.f32 %v1433, 1.442695
        %v1450 = vpow.pop %v1449
        %v1451 = vmul.f32 %v1434, 1.442695
        %v1452 = vpow.pop %v1451
        %v1453 = vmul.f32 %v1435, 1.442695
        %v1454 = vpow.pop %v1453
        %v1455 = vmul.f32 %v1436, 1.442695
        %v1456 = vpow.pop %v1455
        %v1457 = vmul.f32 %v1437, 1.442695
        %v1458 = vpow.pop %v1457
        %v1459 = vmul.f32 %v1438, 1.442695
        %v1460 = vpow.pop %v1459
        %v1461 = vmul.f32 %v1439, 1.442695
        %v1462 = vpow.pop %v1461
        %v1463 = vmul.f32 %v1440, 1.442695
        %v1464 = vpow.pop %v1463
        %v1465 = vmul.f32 %v1441, 1.442695
        %v1466 = vpow.pop %v1465
        %v1467 = vmul.f32 %v1442, 1.442695
        %v1468 = vpow.pop %v1467
        %v1469 = vmul.f32 %v1443, 1.442695
        %v1470 = vpow.pop %v1469
        %v1471 = vmul.f32 %v1444, 1.442695
        %v1472 = vpow.pop %v1471
        %v1473 = vmul.f32 %v1445, 1.442695
        %v1474 = vpow.pop %v1473
        %v1475 = vmul.f32 %v1446, 1.442695
        %v1476 = vpow.pop %v1475
        %v1477 = vmul.f32 %v1447, 1.442695
        %v1478 = vpow.pop %v1477
        %v1479 = vmul.f32 %v1448, 1.442695
        %v1480 = vpow.pop %v1479
        %v1489 = vrot.slane %v1394, 7
        %v1490 = vsel %vm597, %v1489, %v1393
        %v1491 = vrot.slane %v1395, 6
        %v1492 = vsel %vm600, %v1491, %v1490
        %v1493 = vrot.slane %v1396, 5
        %v1494 = vsel %vm603, %v1493, %v1492
        %v1495 = vrot.slane %v1397, 4
        %v1496 = vsel %vm606, %v1495, %v1494
        %v1497 = vrot.slane %v1398, 3
        %v1498 = vsel %vm609, %v1497, %v1496
        %v1499 = vrot.slane %v1399, 2
        %v1500 = vsel %vm612, %v1499, %v1498
        %v1501 = vrot.slane %v1400, 1
        %v1502 = vsel %vm615, %v1501, %v1500
        %v1504 = vsub.f32 %v1301, %v1502
        %v1505 = vmul.f32 %v1504, 1.442695
        %v1506 = vpow.pop %v1505
        %v1507 = vsel %vm1304, %v1450, 0.0
        %v1508 = vsel %vm1304, %v1452, 0.0
        %v1509 = vadd.f32 %v1507, %v1508
        %v1510 = vrot.slane %v1509, 4
        %v1511 = vadd.f32 %v1509, %v1510
        %v1512 = vrot.slane %v1511, 2
        %v1513 = vadd.f32 %v1511, %v1512
        %v1514 = vrot.slane %v1513, 1
        %v1515 = vadd.f32 %v1513, %v1514
        %v1516 = vsel %vm1304, %v1454, 0.0
        %v1517 = vsel %vm1304, %v1456, 0.0
        %v1518 = vadd.f32 %v1516, %v1517
        %v1519 = vrot.slane %v1518, 4
        %v1520 = vadd.f32 %v1518, %v1519
        %v1521 = vrot.slane %v1520, 2
        %v1522 = vadd.f32 %v1520, %v1521
        %v1523 = vrot.slane %v1522, 1
        %v1524 = vadd.f32 %v1522, %v1523
        %v1525 = vsel %vm1304, %v1458, 0.0
        %v1526 = vsel %vm1304, %v1460, 0.0
        %v1527 = vadd.f32 %v1525, %v1526
        %v1528 = vrot.slane %v1527, 4
        %v1529 = vadd.f32 %v1527, %v1528
        %v1530 = vrot.slane %v1529, 2
        %v1531 = vadd.f32 %v1529, %v1530
        %v1532 = vrot.slane %v1531, 1
        %v1533 = vadd.f32 %v1531, %v1532
        %v1534 = vsel %vm1304, %v1462, 0.0
        %v1535 = vsel %vm1304, %v1464, 0.0
        %v1536 = vadd.f32 %v1534, %v1535
        %v1537 = vrot.slane %v1536, 4
        %v1538 = vadd.f32 %v1536, %v1537
        %v1539 = vrot.slane %v1538, 2
        %v1540 = vadd.f32 %v1538, %v1539
        %v1541 = vrot.slane %v1540, 1
        %v1542 = vadd.f32 %v1540, %v1541
        %v1543 = vsel %vm1304, %v1466, 0.0
        %v1544 = vsel %vm1304, %v1468, 0.0
        %v1545 = vadd.f32 %v1543, %v1544
        %v1546 = vrot.slane %v1545, 4
        %v1547 = vadd.f32 %v1545, %v1546
        %v1548 = vrot.slane %v1547, 2
        %v1549 = vadd.f32 %v1547, %v1548
        %v1550 = vrot.slane %v1549, 1
        %v1551 = vadd.f32 %v1549, %v1550
        %v1552 = vsel %vm1304, %v1470, 0.0
        %v1553 = vsel %vm1304, %v1472, 0.0
        %v1554 = vadd.f32 %v1552, %v1553
        %v1555 = vrot.slane %v1554, 4
        %v1556 = vadd.f32 %v1554, %v1555
        %v1557 = vrot.slane %v1556, 2
        %v1558 = vadd.f32 %v1556, %v1557
        %v1559 = vrot.slane %v1558, 1
        %v1560 = vadd.f32 %v1558, %v1559
        %v1561 = vsel %vm1304, %v1474, 0.0
        %v1562 = vsel %vm1304, %v1476, 0.0
        %v1563 = vadd.f32 %v1561, %v1562
        %v1564 = vrot.slane %v1563, 4
        %v1565 = vadd.f32 %v1563, %v1564
        %v1566 = vrot.slane %v1565, 2
        %v1567 = vadd.f32 %v1565, %v1566
        %v1568 = vrot.slane %v1567, 1
        %v1569 = vadd.f32 %v1567, %v1568
        %v1570 = vsel %vm1304, %v1478, 0.0
        %v1571 = vsel %vm1304, %v1480, 0.0
        %v1572 = vadd.f32 %v1570, %v1571
        %v1573 = vrot.slane %v1572, 4
        %v1574 = vadd.f32 %v1572, %v1573
        %v1575 = vrot.slane %v1574, 2
        %v1576 = vadd.f32 %v1574, %v1575
        %v1577 = vrot.slane %v1576, 1
        %v1578 = vadd.f32 %v1576, %v1577
        %v1580 = vrot.slane %v1506, 1
        %v1581 = vrot.slane %v1506, 2
        %v1582 = vrot.slane %v1506, 3
        %v1583 = vrot.slane %v1506, 4
        %v1584 = vrot.slane %v1506, 5
        %v1585 = vrot.slane %v1506, 6
        %v1586 = vrot.slane %v1506, 7
        %v1595 = vadd.f32 %v1515, %v1506
        %v1596 = vadd.f32 %v1524, %v1580
        %v1597 = vadd.f32 %v1533, %v1581
        %v1598 = vadd.f32 %v1542, %v1582
        %v1599 = vadd.f32 %v1551, %v1583
        %v1600 = vadd.f32 %v1560, %v1584
        %v1601 = vadd.f32 %v1569, %v1585
        %v1602 = vadd.f32 %v1578, %v1586
        %v1603 = vrcp.pop %v1595
        %v1604 = vmul.f32 1.0, %v1603
        %v1605 = vrcp.pop %v1596
        %v1606 = vmul.f32 1.0, %v1605
        %v1607 = vrcp.pop %v1597
        %v1608 = vmul.f32 1.0, %v1607
        %v1609 = vrcp.pop %v1598
        %v1610 = vmul.f32 1.0, %v1609
        %v1611 = vrcp.pop %v1599
        %v1612 = vmul.f32 1.0, %v1611
        %v1613 = vrcp.pop %v1600
        %v1614 = vmul.f32 1.0, %v1613
        %v1615 = vrcp.pop %v1601
        %v1616 = vmul.f32 1.0, %v1615
        %v1617 = vrcp.pop %v1602
        %v1618 = vmul.f32 1.0, %v1617
        %v1619 = vlaneseq
        %v1620 = vshrl.u32 %v1619, 7
        %v1621 = vsub.s32 0, %v1620
        %v1622 = vrot.slane %v1604, %v1621
        %v1623 = vlaneseq
        %v1624 = vshrl.u32 %v1623, 7
        %v1625 = vsub.s32 0, %v1624
        %v1626 = vrot.slane %v1606, %v1625
        %v1627 = vlaneseq
        %v1628 = vshrl.u32 %v1627, 7
        %v1629 = vsub.s32 0, %v1628
        %v1630 = vrot.slane %v1608, %v1629
        %v1631 = vlaneseq
        %v1632 = vshrl.u32 %v1631, 7
        %v1633 = vsub.s32 0, %v1632
        %v1634 = vrot.slane %v1610, %v1633
        %v1635 = vlaneseq
        %v1636 = vshrl.u32 %v1635, 7
        %v1637 = vsub.s32 0, %v1636
        %v1638 = vrot.slane %v1612, %v1637
        %v1639 = vlaneseq
        %v1640 = vshrl.u32 %v1639, 7
        %v1641 = vsub.s32 0, %v1640
        %v1642 = vrot.slane %v1614, %v1641
        %v1643 = vlaneseq
        %v1644 = vshrl.u32 %v1643, 7
        %v1645 = vsub.s32 0, %v1644
        %v1646 = vrot.slane %v1616, %v1645
        %v1647 = vlaneseq
        %v1648 = vshrl.u32 %v1647, 7
        %v1649 = vsub.s32 0, %v1648
        %v1650 = vrot.slane %v1618, %v1649
        %v1651 = vmul.f32 %v1450, %v1622
        %v1652 = vmul.f32 %v1452, %v1622
        %v1653 = vmul.f32 %v1454, %v1626
        %v1654 = vmul.f32 %v1456, %v1626
        %v1655 = vmul.f32 %v1458, %v1630
        %v1656 = vmul.f32 %v1460, %v1630
        %v1657 = vmul.f32 %v1462, %v1634
        %v1658 = vmul.f32 %v1464, %v1634
        %v1659 = vmul.f32 %v1466, %v1638
        %v1660 = vmul.f32 %v1468, %v1638
        %v1661 = vmul.f32 %v1470, %v1642
        %v1662 = vmul.f32 %v1472, %v1642
        %v1663 = vmul.f32 %v1474, %v1646
        %v1664 = vmul.f32 %v1476, %v1646
        %v1665 = vmul.f32 %v1478, %v1650
        %v1666 = vmul.f32 %v1480, %v1650
        %v1675 = vrot.slane %v1606, 7
        %v1676 = vsel %vm597, %v1675, %v1604
        %v1677 = vrot.slane %v1608, 6
        %v1678 = vsel %vm600, %v1677, %v1676
        %v1679 = vrot.slane %v1610, 5
        %v1680 = vsel %vm603, %v1679, %v1678
        %v1681 = vrot.slane %v1612, 4
        %v1682 = vsel %vm606, %v1681, %v1680
        %v1683 = vrot.slane %v1614, 3
        %v1684 = vsel %vm609, %v1683, %v1682
        %v1685 = vrot.slane %v1616, 2
        %v1686 = vsel %vm612, %v1685, %v1684
        %v1687 = vrot.slane %v1618, 1
        %v1688 = vsel %vm615, %v1687, %v1686
        %v1690 = vmul.f32 %v1506, %v1688
        %v1692 = vsel %vm1304, %v1651, 0
        %v1695 = vsel %vm1304, %v1652, 0
        %v1698 = vsel %vm1304, %v1653, 0
        %v1701 = vsel %vm1304, %v1654, 0
        %v1704 = vsel %vm1304, %v1655, 0
        %v1707 = vsel %vm1304, %v1656, 0
        %v1710 = vsel %vm1304, %v1657, 0
        %v1713 = vsel %vm1304, %v1658, 0
        %v1716 = vsel %vm1304, %v1659, 0
        %v1719 = vsel %vm1304, %v1660, 0
        %v1722 = vsel %vm1304, %v1661, 0
        %v1725 = vsel %vm1304, %v1662, 0
        %v1728 = vsel %vm1304, %v1663, 0
        %v1731 = vsel %vm1304, %v1664, 0
        %v1734 = vsel %vm1304, %v1665, 0
        %v1737 = vsel %vm1304, %v1666, 0
        %1739 = vmatprep.subr.mxu0 0.0
        %1740 = vmatpush1.msra.mxu0 0.0
        %1741 = vmatprep.subr.mxu0 0.0
        %1742 = vmatpush1.msra.mxu0 0.0
        %1743 = vmatprep.subr.mxu0 0.0
        %1744 = vmatpush1.msra.mxu0 0.0
        %1745 = vmatprep.subr.mxu0 0.0
        %1746 = vmatpush1.msra.mxu0 0.0
        %1747 = vmatprep.subr.mxu0 0.0
        %1748 = vmatpush1.msra.mxu0 0.0
        %1749 = vmatprep.subr.mxu0 0.0
        %1750 = vmatpush1.msra.mxu0 0.0
        %1751 = vmatprep.subr.mxu0 0.0
        %1752 = vmatpush1.msra.mxu0 0.0
        %1753 = vmatprep.subr.mxu0 0.0
        %1754 = vmatpush1.msra.mxu0 0.0
        %1755 = vmatprep.subr.mxu0 0.0
        %1756 = vmatpush1.msra.mxu0 0.0
        %1757 = vmatprep.subr.mxu0 0.0
        %1758 = vmatpush1.msra.mxu0 0.0
        %1759 = vmatprep.subr.mxu0 0.0
        %1760 = vmatpush1.msra.mxu0 0.0
        %1761 = vmatprep.subr.mxu0 0.0
        %1762 = vmatpush1.msra.mxu0 0.0
        %1763 = vmatprep.subr.mxu0 0.0
        %1764 = vmatpush1.msra.mxu0 0.0
        %1765 = vmatprep.subr.mxu0 0.0
        %1766 = vmatpush1.msra.mxu0 0.0
        %1767 = vmatprep.subr.mxu0 0.0
        %1768 = vmatpush1.msra.mxu0 0.0
        %1769 = vmatprep.subr.mxu0 0.0
        %1770 = vmatpush1.msra.mxu0 %v981
        %1771 = vmatprep.subr.mxu0 0.0
        %1772 = vmatpush2.msra.mxu0 0.0
        %1773 = vmatprep.subr.mxu0 0.0
        %1774 = vmatpush2.msra.mxu0 0.0
        %1775 = vmatprep.subr.mxu0 0.0
        %1776 = vmatpush2.msra.mxu0 0.0
        %1777 = vmatprep.subr.mxu0 0.0
        %1778 = vmatpush2.msra.mxu0 0.0
        %1779 = vmatprep.subr.mxu0 0.0
        %1780 = vmatpush2.msra.mxu0 0.0
        %1781 = vmatprep.subr.mxu0 0.0
        %1782 = vmatpush2.msra.mxu0 0.0
        %1783 = vmatprep.subr.mxu0 0.0
        %1784 = vmatpush2.msra.mxu0 0.0
        %1785 = vmatprep.subr.mxu0 0.0
        %1786 = vmatpush2.msra.mxu0 0.0
        %1787 = vmatprep.subr.mxu0 0.0
        %1788 = vmatpush2.msra.mxu0 0.0
        %1789 = vmatprep.subr.mxu0 0.0
        %1790 = vmatpush2.msra.mxu0 0.0
        %1791 = vmatprep.subr.mxu0 0.0
        %1792 = vmatpush2.msra.mxu0 0.0
        %1793 = vmatprep.subr.mxu0 0.0
        %1794 = vmatpush2.msra.mxu0 0.0
        %1795 = vmatprep.subr.mxu0 0.0
        %1796 = vmatpush2.msra.mxu0 0.0
        %1797 = vmatprep.subr.mxu0 0.0
        %1798 = vmatpush2.msra.mxu0 0.0
        %1799 = vmatprep.subr.mxu0 0.0
        %1800 = vmatpush2.msra.mxu0 0.0
        %1801 = vmatprep.subr.mxu0 0.0
        %1802 = vmatpush2.msra.mxu0 0.0
        %1803 = vmatprep.mubr.f32.mxu0 0.0
        %1804 = vmatmul.mubr.f32.gmra.mxu0 %v1692
        %v1805 = vpop.f32.mrf.mxu0
        %v1806 = vadd.f32 0.0, %v1805
        %v1807 = vpop.f32.mrf.mxu0
        %1808 = vmatprep.mubr.f32.mxu0 0.0
        %1809 = vmatmul.mubr.f32.gmra.mxu0 %v1695
        %v1810 = vpop.f32.mrf.mxu0
        %v1811 = vadd.f32 0.0, %v1810
        %v1812 = vpop.f32.mrf.mxu0
        %1813 = vmatprep.mubr.f32.mxu0 0.0
        %1814 = vmatmul.mubr.f32.gmra.mxu0 %v1698
        %v1815 = vpop.f32.mrf.mxu0
        %v1816 = vadd.f32 0.0, %v1815
        %v1817 = vpop.f32.mrf.mxu0
        %1818 = vmatprep.mubr.f32.mxu0 0.0
        %1819 = vmatmul.mubr.f32.gmra.mxu0 %v1701
        %v1820 = vpop.f32.mrf.mxu0
        %v1821 = vadd.f32 0.0, %v1820
        %v1822 = vpop.f32.mrf.mxu0
        %1823 = vmatprep.mubr.f32.mxu0 0.0
        %1824 = vmatmul.mubr.f32.gmra.mxu0 %v1704
        %v1825 = vpop.f32.mrf.mxu0
        %v1826 = vadd.f32 0.0, %v1825
        %v1827 = vpop.f32.mrf.mxu0
        %1828 = vmatprep.mubr.f32.mxu0 0.0
        %1829 = vmatmul.mubr.f32.gmra.mxu0 %v1707
        %v1830 = vpop.f32.mrf.mxu0
        %v1831 = vadd.f32 0.0, %v1830
        %v1832 = vpop.f32.mrf.mxu0
        %1833 = vmatprep.mubr.f32.mxu0 0.0
        %1834 = vmatmul.mubr.f32.gmra.mxu0 %v1710
        %v1835 = vpop.f32.mrf.mxu0
        %v1836 = vadd.f32 0.0, %v1835
        %v1837 = vpop.f32.mrf.mxu0
        %1838 = vmatprep.mubr.f32.mxu0 0.0
        %1839 = vmatmul.mubr.f32.gmra.mxu0 %v1713
        %v1840 = vpop.f32.mrf.mxu0
        %v1841 = vadd.f32 0.0, %v1840
        %v1842 = vpop.f32.mrf.mxu0
        %1843 = vmatprep.mubr.f32.mxu0 0.0
        %1844 = vmatmul.mubr.f32.gmra.mxu0 %v1716
        %v1845 = vpop.f32.mrf.mxu0
        %v1846 = vadd.f32 0.0, %v1845
        %v1847 = vpop.f32.mrf.mxu0
        %1848 = vmatprep.mubr.f32.mxu0 0.0
        %1849 = vmatmul.mubr.f32.gmra.mxu0 %v1719
        %v1850 = vpop.f32.mrf.mxu0
        %v1851 = vadd.f32 0.0, %v1850
        %v1852 = vpop.f32.mrf.mxu0
        %1853 = vmatprep.mubr.f32.mxu0 0.0
        %1854 = vmatmul.mubr.f32.gmra.mxu0 %v1722
        %v1855 = vpop.f32.mrf.mxu0
        %v1856 = vadd.f32 0.0, %v1855
        %v1857 = vpop.f32.mrf.mxu0
        %1858 = vmatprep.mubr.f32.mxu0 0.0
        %1859 = vmatmul.mubr.f32.gmra.mxu0 %v1725
        %v1860 = vpop.f32.mrf.mxu0
        %v1861 = vadd.f32 0.0, %v1860
        %v1862 = vpop.f32.mrf.mxu0
        %1863 = vmatprep.mubr.f32.mxu0 0.0
        %1864 = vmatmul.mubr.f32.gmra.mxu0 %v1728
        %v1865 = vpop.f32.mrf.mxu0
        %v1866 = vadd.f32 0.0, %v1865
        %v1867 = vpop.f32.mrf.mxu0
        %1868 = vmatprep.mubr.f32.mxu0 0.0
        %1869 = vmatmul.mubr.f32.gmra.mxu0 %v1731
        %v1870 = vpop.f32.mrf.mxu0
        %v1871 = vadd.f32 0.0, %v1870
        %v1872 = vpop.f32.mrf.mxu0
        %1873 = vmatprep.mubr.f32.mxu0 0.0
        %1874 = vmatmul.mubr.f32.gmra.mxu0 %v1734
        %v1875 = vpop.f32.mrf.mxu0
        %v1876 = vadd.f32 0.0, %v1875
        %v1877 = vpop.f32.mrf.mxu0
        %1878 = vmatprep.mubr.f32.mxu0 0.0
        %1879 = vmatmul.mubr.f32.gmra.mxu0 %v1737
        %v1880 = vpop.f32.mrf.mxu0
        %v1881 = vadd.f32 0.0, %v1880
        %v1882 = vpop.f32.mrf.mxu0
        %1883 = vdwg.mxu0
        %v1885 = vsel %vm1304, %v1690, 0
        %1887 = vmatprep.subr.mxu0 0.0
        %1888 = vmatpush1.msra.mxu0 0.0
        %1889 = vmatprep.subr.mxu0 0.0
        %1890 = vmatpush1.msra.mxu0 0.0
        %1891 = vmatprep.subr.mxu0 0.0
        %1892 = vmatpush1.msra.mxu0 0.0
        %1893 = vmatprep.subr.mxu0 0.0
        %1894 = vmatpush1.msra.mxu0 0.0
        %1895 = vmatprep.subr.mxu0 0.0
        %1896 = vmatpush1.msra.mxu0 0.0
        %1897 = vmatprep.subr.mxu0 0.0
        %1898 = vmatpush1.msra.mxu0 0.0
        %1899 = vmatprep.subr.mxu0 0.0
        %1900 = vmatpush1.msra.mxu0 0.0
        %1901 = vmatprep.subr.mxu0 0.0
        %1902 = vmatpush1.msra.mxu0 0.0
        %1903 = vmatprep.subr.mxu0 0.0
        %1904 = vmatpush1.msra.mxu0 0.0
        %1905 = vmatprep.subr.mxu0 0.0
        %1906 = vmatpush1.msra.mxu0 0.0
        %1907 = vmatprep.subr.mxu0 0.0
        %1908 = vmatpush1.msra.mxu0 0.0
        %1909 = vmatprep.subr.mxu0 0.0
        %1910 = vmatpush1.msra.mxu0 0.0
        %1911 = vmatprep.subr.mxu0 0.0
        %1912 = vmatpush1.msra.mxu0 0.0
        %1913 = vmatprep.subr.mxu0 0.0
        %1914 = vmatpush1.msra.mxu0 0.0
        %1915 = vmatprep.subr.mxu0 0.0
        %1916 = vmatpush1.msra.mxu0 0.0
        %1917 = vmatprep.subr.mxu0 0.0
        %1918 = vmatpush1.msra.mxu0 %v981
        %1919 = vmatprep.subr.mxu0 0.0
        %1920 = vmatpush2.msra.mxu0 0.0
        %1921 = vmatprep.subr.mxu0 0.0
        %1922 = vmatpush2.msra.mxu0 0.0
        %1923 = vmatprep.subr.mxu0 0.0
        %1924 = vmatpush2.msra.mxu0 0.0
        %1925 = vmatprep.subr.mxu0 0.0
        %1926 = vmatpush2.msra.mxu0 0.0
        %1927 = vmatprep.subr.mxu0 0.0
        %1928 = vmatpush2.msra.mxu0 0.0
        %1929 = vmatprep.subr.mxu0 0.0
        %1930 = vmatpush2.msra.mxu0 0.0
        %1931 = vmatprep.subr.mxu0 0.0
        %1932 = vmatpush2.msra.mxu0 0.0
        %1933 = vmatprep.subr.mxu0 0.0
        %1934 = vmatpush2.msra.mxu0 0.0
        %1935 = vmatprep.subr.mxu0 0.0
        %1936 = vmatpush2.msra.mxu0 0.0
        %1937 = vmatprep.subr.mxu0 0.0
        %1938 = vmatpush2.msra.mxu0 0.0
        %1939 = vmatprep.subr.mxu0 0.0
        %1940 = vmatpush2.msra.mxu0 0.0
        %1941 = vmatprep.subr.mxu0 0.0
        %1942 = vmatpush2.msra.mxu0 0.0
        %1943 = vmatprep.subr.mxu0 0.0
        %1944 = vmatpush2.msra.mxu0 0.0
        %1945 = vmatprep.subr.mxu0 0.0
        %1946 = vmatpush2.msra.mxu0 0.0
        %1947 = vmatprep.subr.mxu0 0.0
        %1948 = vmatpush2.msra.mxu0 0.0
        %1949 = vmatprep.subr.mxu0 0.0
        %1950 = vmatpush2.msra.mxu0 0.0
        %1951 = vmatprep.mubr.f32.mxu0 0.0
        %1952 = vmatmul.mubr.f32.gmra.mxu0 %v1885
        %v1953 = vpop.f32.mrf.mxu0
        %v1954 = vadd.f32 0.0, %v1953
        %v1955 = vpop.f32.mrf.mxu0
        %1956 = vdwg.mxu0
        %v1957 = vmul.f32 %v1806, %v873
        %v1958 = vmul.f32 %v1811, %v879
        %v1959 = vmul.f32 %v1816, %v885
        %v1960 = vmul.f32 %v1821, %v891
        %v1961 = vmul.f32 %v1826, %v897
        %v1962 = vmul.f32 %v1831, %v903
        %v1963 = vmul.f32 %v1836, %v909
        %v1964 = vmul.f32 %v1841, %v915
        %v1965 = vmul.f32 %v1846, %v921
        %v1966 = vmul.f32 %v1851, %v927
        %v1967 = vmul.f32 %v1856, %v933
        %v1968 = vmul.f32 %v1861, %v939
        %v1969 = vmul.f32 %v1866, %v945
        %v1970 = vmul.f32 %v1871, %v951
        %v1971 = vmul.f32 %v1876, %v957
        %v1972 = vmul.f32 %v1881, %v963
        %v1973 = vadd.f32 %v1957, %v1958
        %v1974 = vrot.slane %v1973, 4
        %v1975 = vadd.f32 %v1973, %v1974
        %v1976 = vrot.slane %v1975, 2
        %v1977 = vadd.f32 %v1975, %v1976
        %v1978 = vrot.slane %v1977, 1
        %v1979 = vadd.f32 %v1977, %v1978
        %v1980 = vadd.f32 %v1959, %v1960
        %v1981 = vrot.slane %v1980, 4
        %v1982 = vadd.f32 %v1980, %v1981
        %v1983 = vrot.slane %v1982, 2
        %v1984 = vadd.f32 %v1982, %v1983
        %v1985 = vrot.slane %v1984, 1
        %v1986 = vadd.f32 %v1984, %v1985
        %v1987 = vadd.f32 %v1961, %v1962
        %v1988 = vrot.slane %v1987, 4
        %v1989 = vadd.f32 %v1987, %v1988
        %v1990 = vrot.slane %v1989, 2
        %v1991 = vadd.f32 %v1989, %v1990
        %v1992 = vrot.slane %v1991, 1
        %v1993 = vadd.f32 %v1991, %v1992
        %v1994 = vadd.f32 %v1963, %v1964
        %v1995 = vrot.slane %v1994, 4
        %v1996 = vadd.f32 %v1994, %v1995
        %v1997 = vrot.slane %v1996, 2
        %v1998 = vadd.f32 %v1996, %v1997
        %v1999 = vrot.slane %v1998, 1
        %v2000 = vadd.f32 %v1998, %v1999
        %v2001 = vadd.f32 %v1965, %v1966
        %v2002 = vrot.slane %v2001, 4
        %v2003 = vadd.f32 %v2001, %v2002
        %v2004 = vrot.slane %v2003, 2
        %v2005 = vadd.f32 %v2003, %v2004
        %v2006 = vrot.slane %v2005, 1
        %v2007 = vadd.f32 %v2005, %v2006
        %v2008 = vadd.f32 %v1967, %v1968
        %v2009 = vrot.slane %v2008, 4
        %v2010 = vadd.f32 %v2008, %v2009
        %v2011 = vrot.slane %v2010, 2
        %v2012 = vadd.f32 %v2010, %v2011
        %v2013 = vrot.slane %v2012, 1
        %v2014 = vadd.f32 %v2012, %v2013
        %v2015 = vadd.f32 %v1969, %v1970
        %v2016 = vrot.slane %v2015, 4
        %v2017 = vadd.f32 %v2015, %v2016
        %v2018 = vrot.slane %v2017, 2
        %v2019 = vadd.f32 %v2017, %v2018
        %v2020 = vrot.slane %v2019, 1
        %v2021 = vadd.f32 %v2019, %v2020
        %v2022 = vadd.f32 %v1971, %v1972
        %v2023 = vrot.slane %v2022, 4
        %v2024 = vadd.f32 %v2022, %v2023
        %v2025 = vrot.slane %v2024, 2
        %v2026 = vadd.f32 %v2024, %v2025
        %v2027 = vrot.slane %v2026, 1
        %v2028 = vadd.f32 %v2026, %v2027
        %v2029 = vmul.f32 %v1954, %v802
        %v2031 = vrot.slane %v2029, 1
        %v2032 = vrot.slane %v2029, 2
        %v2033 = vrot.slane %v2029, 3
        %v2034 = vrot.slane %v2029, 4
        %v2035 = vrot.slane %v2029, 5
        %v2036 = vrot.slane %v2029, 6
        %v2037 = vrot.slane %v2029, 7
        %v2046 = vadd.f32 %v1979, %v2029
        %v2047 = vadd.f32 %v1986, %v2031
        %v2048 = vadd.f32 %v1993, %v2032
        %v2049 = vadd.f32 %v2000, %v2033
        %v2050 = vadd.f32 %v2007, %v2034
        %v2051 = vadd.f32 %v2014, %v2035
        %v2052 = vadd.f32 %v2021, %v2036
        %v2053 = vadd.f32 %v2028, %v2037
        %v2054 = vld [vmem:[#allocation8] sm:$0xff]
        %v2055 = vld [vmem:[#allocation8 + $0x8] sm:$0xff]
        %v2056 = vld [vmem:[#allocation8 + $0x10] sm:$0xff]
        %v2057 = vld [vmem:[#allocation8 + $0x18] sm:$0xff]
        %v2058 = vld [vmem:[#allocation8 + $0x20] sm:$0xff]
        %v2059 = vld [vmem:[#allocation8 + $0x28] sm:$0xff]
        %v2060 = vld [vmem:[#allocation8 + $0x30] sm:$0xff]
        %v2061 = vld [vmem:[#allocation8 + $0x38] sm:$0xff]
        %v2062 = vld [vmem:[#allocation8 + $0x40] sm:$0xff]
        %v2063 = vld [vmem:[#allocation8 + $0x48] sm:$0xff]
        %v2064 = vld [vmem:[#allocation8 + $0x50] sm:$0xff]
        %v2065 = vld [vmem:[#allocation8 + $0x58] sm:$0xff]
        %v2066 = vld [vmem:[#allocation8 + $0x60] sm:$0xff]
        %v2067 = vld [vmem:[#allocation8 + $0x68] sm:$0xff]
        %v2068 = vld [vmem:[#allocation8 + $0x70] sm:$0xff]
        %v2069 = vld [vmem:[#allocation8 + $0x78] sm:$0xff]
        %v2070 = vld [vmem:[%s8] sm:$0x1]
        %v2072 = vlaneseq
        %v2073 = vshrl.u32 %v2072, 7
        %v2074 = vsub.s32 0, %v2073
        %v2075 = vrot.slane %v2070, %v2074
        %v2085 = vrot.slane %v2047, 7
        %v2086 = vsel %vm597, %v2085, %v2046
        %v2087 = vrot.slane %v2048, 6
        %v2088 = vsel %vm600, %v2087, %v2086
        %v2089 = vrot.slane %v2049, 5
        %v2090 = vsel %vm603, %v2089, %v2088
        %v2091 = vrot.slane %v2050, 4
        %v2092 = vsel %vm606, %v2091, %v2090
        %v2093 = vrot.slane %v2051, 3
        %v2094 = vsel %vm609, %v2093, %v2092
        %v2095 = vrot.slane %v2052, 2
        %v2096 = vsel %vm612, %v2095, %v2094
        %v2097 = vrot.slane %v2053, 1
        %v2098 = vsel %vm615, %v2097, %v2096
        %2100 = vmatprep.subr.mxu0 0.0
        %2101 = vmatpush1.msra.mxu0 %v2069
        %2102 = vmatprep.subr.mxu0 0.0
        %2103 = vmatpush1.msra.mxu0 %v2068
        %2104 = vmatprep.subr.mxu0 0.0
        %2105 = vmatpush1.msra.mxu0 %v2067
        %2106 = vmatprep.subr.mxu0 0.0
        %2107 = vmatpush1.msra.mxu0 %v2066
        %2108 = vmatprep.subr.mxu0 0.0
        %2109 = vmatpush1.msra.mxu0 %v2065
        %2110 = vmatprep.subr.mxu0 0.0
        %2111 = vmatpush1.msra.mxu0 %v2064
        %2112 = vmatprep.subr.mxu0 0.0
        %2113 = vmatpush1.msra.mxu0 %v2063
        %2114 = vmatprep.subr.mxu0 0.0
        %2115 = vmatpush1.msra.mxu0 %v2062
        %2116 = vmatprep.subr.mxu0 0.0
        %2117 = vmatpush1.msra.mxu0 %v2061
        %2118 = vmatprep.subr.mxu0 0.0
        %2119 = vmatpush1.msra.mxu0 %v2060
        %2120 = vmatprep.subr.mxu0 0.0
        %2121 = vmatpush1.msra.mxu0 %v2059
        %2122 = vmatprep.subr.mxu0 0.0
        %2123 = vmatpush1.msra.mxu0 %v2058
        %2124 = vmatprep.subr.mxu0 0.0
        %2125 = vmatpush1.msra.mxu0 %v2057
        %2126 = vmatprep.subr.mxu0 0.0
        %2127 = vmatpush1.msra.mxu0 %v2056
        %2128 = vmatprep.subr.mxu0 0.0
        %2129 = vmatpush1.msra.mxu0 %v2055
        %2130 = vmatprep.subr.mxu0 0.0
        %2131 = vmatpush1.msra.mxu0 %v2054
        %2132 = vmatprep.subr.mxu0 0.0
        %2133 = vmatpush2.msra.mxu0 0.0
        %2134 = vmatprep.subr.mxu0 0.0
        %2135 = vmatpush2.msra.mxu0 0.0
        %2136 = vmatprep.subr.mxu0 0.0
        %2137 = vmatpush2.msra.mxu0 0.0
        %2138 = vmatprep.subr.mxu0 0.0
        %2139 = vmatpush2.msra.mxu0 0.0
        %2140 = vmatprep.subr.mxu0 0.0
        %2141 = vmatpush2.msra.mxu0 0.0
        %2142 = vmatprep.subr.mxu0 0.0
        %2143 = vmatpush2.msra.mxu0 0.0
        %2144 = vmatprep.subr.mxu0 0.0
        %2145 = vmatpush2.msra.mxu0 0.0
        %2146 = vmatprep.subr.mxu0 0.0
        %2147 = vmatpush2.msra.mxu0 0.0
        %2148 = vmatprep.subr.mxu0 0.0
        %2149 = vmatpush2.msra.mxu0 0.0
        %2150 = vmatprep.subr.mxu0 0.0
        %2151 = vmatpush2.msra.mxu0 0.0
        %2152 = vmatprep.subr.mxu0 0.0
        %2153 = vmatpush2.msra.mxu0 0.0
        %2154 = vmatprep.subr.mxu0 0.0
        %2155 = vmatpush2.msra.mxu0 0.0
        %2156 = vmatprep.subr.mxu0 0.0
        %2157 = vmatpush2.msra.mxu0 0.0
        %2158 = vmatprep.subr.mxu0 0.0
        %2159 = vmatpush2.msra.mxu0 0.0
        %2160 = vmatprep.subr.mxu0 0.0
        %2161 = vmatpush2.msra.mxu0 0.0
        %2162 = vmatprep.subr.mxu0 0.0
        %2163 = vmatpush2.msra.mxu0 0.0
        %2164 = vmatprep.mubr.f32.mxu0 0.0
        %2165 = vmatmul.mubr.f32.gmra.mxu0 %v2098
        %v2166 = vpop.f32.mrf.mxu0
        %v2167 = vadd.f32 %v2075, %v2166
        %v2168 = vpop.f32.mrf.mxu0
        %2169 = vdwg.mxu0
        %2170 = vst [vmem:[%s449] sm:$0xff] %v2167
        %s2171 = sand.u32 %s274, 1
        %s2172 = scalar_lea.sflag [#allocation4], %s2171
        %s2173 = sand.u32 %s274, 1
        %s2174 = smul.addr %s2173, 8
        %s2175 = scalar_lea.vmem [#allocation10], %s2174
        // Predicated region
        $region81: #{tpu_custom_call.1} parent=63 // pred_check
          %p2176 = pneg %p284
        $region82: #{tpu_custom_call.1} parent=63 // pred_check_branch
          %2178 = sbr.rel (%p2176) target = $region84
        $region83: #{tpu_custom_call.1} parent=63 // pred_region
          %s2180 = ssub.s32 128, 128
          %2181 = vsyncadd %s2172, %s2180
          %s2182 = smul.addr %s30, 128
          %s2183 = scalar_lea.hbm %s11, %s2182
          %s2185 = sshll.u32 %s2175, 4
          %s2186 = int_to_ptr.vmem [resolvable:$true] %s2185
          %2188 = dma.vmem_to_hbm [thread:$0]  %s2186, 128, %s2183, %s2172
        $region84: #{tpu_custom_call.1} parent=63 // pred_fallthru
          _
      $region64: #{tpu_custom_call.1} parent=5 // pred_fallthru
        _
      %p2189 = scmp.le.s32.totalorder 2, %s25
      // Predicated region
      $region85: #{tpu_custom_call.1} parent=5 // pred_check
        %p2190 = pneg %p2189
      $region86: #{tpu_custom_call.1} parent=5 // pred_check_branch
        %2192 = sbr.rel (%p2190) target = $region88
      $region87: #{tpu_custom_call.1} parent=5 // pred_region
        %s2193 = ssub.s32 %s25, 2
        // Predicated region
        $region89: #{tpu_custom_call.1} parent=87 // pred_check
          %p2194 = pneg %p290
        $region90: #{tpu_custom_call.1} parent=87 // pred_check_branch
          %2196 = sbr.rel (%p2194) target = $region92
        $region91: #{tpu_custom_call.1} parent=87 // pred_region
          %s2197 = sand.u32 %s275, 1
          %s2198 = scalar_lea.sflag [#allocation4], %s2197
          %s2199 = sand.u32 %s275, 1
          %s2200 = smul.addr %s2199, 8
          %s2201 = scalar_lea.vmem [#allocation10], %s2200
          %2202 = dma.done %s2198, 128
        $region92: #{tpu_custom_call.1} parent=87 // pred_fallthru
          _
      $region88: #{tpu_custom_call.1} parent=5 // pred_fallthru
        _
    $region6: #{tpu_custom_call.1} parent=1 // loop_footer
      %s29 = sadd.s32 1, %s25
    $region7: #{tpu_custom_call.1} parent=1 // loop_footer_branch
      %24 = sbr.rel target = $region3
    $region8: #{tpu_custom_call.1} parent=1 // loop_exit
      _
    %2203 = vsyncpa [#allocation3], 1
    %s2204 = scalar_lea.sflag [#allocation3], 1
    %2205 = vsyncpa %s2204, 1
    %2206 = vsyncpa [#allocation6], 1
    %2207 = vsyncpa [#allocation9], 1
    %2208 = vsyncpa [#allocation4], 1
    %s2209 = scalar_lea.sflag [#allocation4], 1
    %2210 = vsyncpa %s2209, 1

</llo_original>
